<compile_context>
chip_gen: v5e
topology: v5e:2x2
jax: 0.10.0
libtpu: 0.0.40
codegen_flags: <defaults>
</compile_context>

<pallas_src>
import math
from functools import partial

import jax
import jax.numpy as jnp
from jax.experimental import pallas as pl
from jax.experimental.pallas import tpu as pltpu

# ---------------- small synthetic hyper-params ----------------
NUM_LAYERS = 2
NUM_HEADS = 4
D_MODEL = 32          # hidden_size == d_model
FF_SIZE = 64          # dim_feedforward
VOCAB = 128           # vocab_size (also PositionalEncoding max_len); multiple of 128 -> lane-dense
T = 8                 # target sequence length
S = 8                 # encoder (memory) sequence length
B = 2                 # batch


# ---------------- shared math helpers ----------------
def _layer_norm(x, w, b, eps):
    m = jnp.mean(x, axis=-1, keepdims=True)
    v = jnp.mean(jnp.square(x - m), axis=-1, keepdims=True)
    return (x - m) * jax.lax.rsqrt(v + eps) * w + b


# ---------------- in-kernel multi-head attention on batch-flattened slabs ----------------
def _mha_flat(q_in, kv_in, in_wT, in_b, out_wT, out_b, mask, nb, lq, lkv, nheads):
    """nn.MultiheadAttention (eval) on batch-flattened rows.

    q_in: (nb*lq, D), kv_in: (nb*lkv, D), in_wT: (D, 3D) with 1/sqrt(hd) pre-folded into the
    Q columns, in_b: (1, 3D) (Q part pre-scaled), out_wT: (D, D), out_b: (1, D),
    mask: additive float (lq, lkv) shared over batch.
    """
    d = q_in.shape[-1]
    hd = d // nheads
    if q_in is kv_in:
        # self-attention: single fused (L, D) @ (D, 3D) projection
        qkv = jnp.dot(q_in, in_wT, preferred_element_type=jnp.float32) + in_b
        q_all, kv_all = qkv[:, :d], qkv[:, d:]
    else:
        q_all = jnp.dot(q_in, in_wT[:, :d], preferred_element_type=jnp.float32) + in_b[:, :d]
        kv_all = jnp.dot(kv_in, in_wT[:, d:], preferred_element_type=jnp.float32) + in_b[:, d:]

    outs = []
    for b in range(nb):                         # static: per-batch row blocks (sublane slices)
        qb = q_all[b * lq:(b + 1) * lq, :]
        kb = kv_all[b * lkv:(b + 1) * lkv, :d]
        vb = kv_all[b * lkv:(b + 1) * lkv, d:]
        heads = []
        for h in range(nheads):                 # static: scores/PV only; no per-head out-proj
            sl = slice(h * hd, (h + 1) * hd)
            s = jax.lax.dot_general(qb[:, sl], kb[:, sl], (((1,), (1,)), ((), ())),
                                    preferred_element_type=jnp.float32)     # (lq, lkv)
            s = s + mask
            s = s - jnp.max(s, axis=-1, keepdims=True)
            p = jnp.exp(s)
            p = p * pl.reciprocal(jnp.sum(p, axis=-1, keepdims=True), approx=True)
            heads.append(jnp.dot(p, vb[:, sl], preferred_element_type=jnp.float32))
        outs.append(jnp.concatenate(heads, axis=-1))        # lane-concat -> (lq, D)
    merged = jnp.concatenate(outs, axis=0)                   # (nb*lq, D)
    # single output projection for all batches & heads
    return jnp.dot(merged, out_wT, preferred_element_type=jnp.float32) + out_b


# ---------------- the fused Pallas kernel ----------------
def _fused_decoder_kernel(nb, lq, lkv, nheads,
                          x_ref, mem_ref, amask_ref, smask_ref,
                          n1w_ref, n1b_ref, sa_inw_ref, sa_inb_ref, sa_ow_ref, sa_ob_ref,
                          n2w_ref, n2b_ref, ca_inw_ref, ca_inb_ref, ca_ow_ref, ca_ob_ref,
                          f_lnw_ref, f_lnb_ref, f_w1_ref, f_b1_ref, f_w2_ref, f_b2_ref,
                          lnw_ref, lnb_ref, wout_ref,
                          out_ref):
    x = x_ref[...]            # (nb*lq, D)
    mem = mem_ref[...]        # (nb*lkv, D)
    amask = amask_ref[...]    # (lq, lq)
    smask = smask_ref[...]    # (lq, lkv)

    # --- masked self-attention (pre-norm, residual) ---
    xn = _layer_norm(x, n1w_ref[...], n1b_ref[...], 1e-5)
    sa = _mha_flat(xn, xn, sa_inw_ref[...], sa_inb_ref[...], sa_ow_ref[...], sa_ob_ref[...],
                   amask, nb, lq, lq, nheads)
    x = x + sa

    # --- cross attention (pre-norm, residual) ---
    xn2 = _layer_norm(x, n2w_ref[...], n2b_ref[...], 1e-5)
    ca = _mha_flat(xn2, mem, ca_inw_ref[...], ca_inb_ref[...], ca_ow_ref[...], ca_ob_ref[...],
                   smask, nb, lq, lkv, nheads)
    x3 = x + ca

    # --- position-wise feed forward (pre-norm, residual) ---
    fn = _layer_norm(x3, f_lnw_ref[...], f_lnb_ref[...], 1e-6)
    h = jnp.maximum(jnp.dot(fn, f_w1_ref[...], preferred_element_type=jnp.float32)
                    + f_b1_ref[...], 0.0)
    y = jnp.dot(h, f_w2_ref[...], preferred_element_type=jnp.float32) + f_b2_ref[...] + x3

    # --- final LayerNorm + vocab projection (fused; V=128 -> lane-dense store) ---
    yn = _layer_norm(y, lnw_ref[...], lnb_ref[...], 1e-6)
    out_ref[...] = jnp.dot(yn, wout_ref[...],
                           preferred_element_type=jnp.float32).astype(out_ref.dtype)


# ---------------- wrapper ----------------
def fused_decoder_call(x_flat, mem_flat, amask, smask, lp, lnw, lnb, woutT,
                       nb, lq, lkv, nheads):
    v = woutT.shape[1]
    args = [x_flat, mem_flat, amask, smask,
            lp['n1w'], lp['n1b'], lp['sa_inwT'], lp['sa_inb'], lp['sa_owT'], lp['sa_ob'],
            lp['n2w'], lp['n2b'], lp['ca_inwT'], lp['ca_inb'], lp['ca_owT'], lp['ca_ob'],
            lp['f_lnw'], lp['f_lnb'], lp['f_w1T'], lp['f_b1'], lp['f_w2T'], lp['f_b2'],
            lnw, lnb, woutT]
    vmem = pl.BlockSpec(memory_space=pltpu.MemorySpace.VMEM)     # whole array resident in VMEM
    return pl.pallas_call(
        partial(_fused_decoder_kernel, nb, lq, lkv, nheads),
        in_specs=[vmem] * len(args),
        out_specs=pl.BlockSpec(memory_space=pltpu.MemorySpace.VMEM),
        out_shape=jax.ShapeDtypeStruct((nb * lq, v), x_flat.dtype),
    )(*args)


def _fold_q_scale(p, nheads):
    """Fold the 1/sqrt(head_dim) attention scale into the Q projection weight/bias."""
    d = p['n1w'].shape[-1]
    hd = d // nheads
    scale = 1.0 / math.sqrt(hd)

    def fold(wT, bias):
        wT = jnp.concatenate([wT[:, :d] * scale, wT[:, d:]], axis=1)
        bias = jnp.concatenate([bias[:, :d] * scale, bias[:, d:]], axis=1)
        return wT, bias

    q = dict(p)
    q['sa_inwT'], q['sa_inb'] = fold(p['sa_inwT'], p['sa_inb'])
    q['ca_inwT'], q['ca_inb'] = fold(p['ca_inwT'], p['ca_inb'])
    return q


# ---------------- parameters ----------------
def positional_encoding(max_len, d):
    position = jnp.arange(max_len, dtype=jnp.float32)[:, None]
    div_term = jnp.exp(jnp.arange(0, d, 2, dtype=jnp.float32) * (-math.log(10000.0) / d))
    ang = position * div_term
    pe = jnp.stack([jnp.sin(ang), jnp.cos(ang)], axis=-1).reshape(max_len, d)
    return pe[None]   # (1, max_len, d)


def init_layer_params(key, d, ff):
    ks = jax.random.split(key, 12)
    std = 0.05
    sa_in_w = std * jax.random.normal(ks[0], (3 * d, d), jnp.float32)
    sa_out_w = std * jax.random.normal(ks[1], (d, d), jnp.float32)
    ca_in_w = std * jax.random.normal(ks[2], (3 * d, d), jnp.float32)
    ca_out_w = std * jax.random.normal(ks[3], (d, d), jnp.float32)
    w1 = std * jax.random.normal(ks[4], (ff, d), jnp.float32)
    w2 = std * jax.random.normal(ks[5], (d, ff), jnp.float32)
    ln = lambda k: (1.0 + 0.1 * jax.random.normal(k, (1, d), jnp.float32))
    return dict(
        n1w=ln(ks[6]), n1b=jnp.zeros((1, d), jnp.float32),
        sa_inwT=sa_in_w.T, sa_inb=0.01 * jax.random.normal(ks[7], (1, 3 * d), jnp.float32),
        sa_owT=sa_out_w.T, sa_ob=jnp.zeros((1, d), jnp.float32),
        n2w=ln(ks[8]), n2b=jnp.zeros((1, d), jnp.float32),
        ca_inwT=ca_in_w.T, ca_inb=0.01 * jax.random.normal(ks[9], (1, 3 * d), jnp.float32),
        ca_owT=ca_out_w.T, ca_ob=jnp.zeros((1, d), jnp.float32),
        f_lnw=ln(ks[10]), f_lnb=jnp.zeros((1, d), jnp.float32),
        f_w1T=w1.T, f_b1=0.01 * jax.random.normal(ks[11], (1, ff), jnp.float32),
        f_w2T=w2.T, f_b2=jnp.zeros((1, d), jnp.float32),
    )


def init_params(key):
    keys = jax.random.split(key, NUM_LAYERS + 2)
    layers = [init_layer_params(keys[i], D_MODEL, FF_SIZE) for i in range(NUM_LAYERS)]
    kln, kout = keys[-2], keys[-1]
    return dict(
        pe=positional_encoding(VOCAB, D_MODEL),
        layers=layers,
        lnw=1.0 + 0.1 * jax.random.normal(kln, (1, D_MODEL), jnp.float32),
        lnb=jnp.zeros((1, D_MODEL), jnp.float32),
        woutT=(0.05 * jax.random.normal(kout, (VOCAB, D_MODEL), jnp.float32)).T,
    )


# ---------------- full forward (Pallas) ----------------
def transformer_decoder_forward(params, trg_embed, encoder_output, attn_mask, src_mask):
    t, b, d = trg_embed.shape
    s = encoder_output.shape[0]
    # PositionalEncoding (literal port): pe[:, :x.size(1)] with x of shape (T, B, D),
    # i.e. a (1, B, D) slab broadcast-added over T.  emb_dropout / pe dropout = identity.
    x = trg_embed + params['pe'][:, :b]
    # wrapper glue on ~2 KiB arrays: batch-major, fold (B, T) onto the row axis.
    x_flat = jnp.transpose(x, (1, 0, 2)).reshape(b * t, d)
    mem_flat = jnp.transpose(encoder_output, (1, 0, 2)).reshape(b * s, d)
    # The module never chains layers (every layer consumes the same x; only the last y
    # survives), so only layers[-1] affects the output -> evaluate just that layer.
    lp = _fold_q_scale(params['layers'][-1], NUM_HEADS)
    out_flat = fused_decoder_call(x_flat, mem_flat, attn_mask, src_mask, lp,
                                  params['lnw'], params['lnb'], params['woutT'],
                                  b, t, s, NUM_HEADS)
    return jnp.transpose(out_flat.reshape(b, t, VOCAB), (1, 0, 2))   # (T, B, VOCAB)


# ---------------- pure-JAX reference (faithful layer loop) for validation ----------------
def _mha_ref(q_in, k_in, v_in, in_wT, in_b, out_wT, out_b, mask, nheads):
    d = q_in.shape[-1]
    hd = d // nheads
    scale = 1.0 / math.sqrt(hd)
    q = jnp.dot(q_in, in_wT[:, 0:d]) + in_b[:, 0:d]
    k = jnp.dot(k_in, in_wT[:, d:2 * d]) + in_b[:, d:2 * d]
    v = jnp.dot(v_in, in_wT[:, 2 * d:3 * d]) + in_b[:, 2 * d:3 * d]
    out = jnp.zeros((q_in.shape[0], out_wT.shape[1]), jnp.float32)
    for h in range(nheads):
        sl = slice(h * hd, (h + 1) * hd)
        s = (q[:, sl] * scale) @ k[:, sl].T + mask
        s = s - jnp.max(s, axis=-1, keepdims=True)
        p = jnp.exp(s)
        p = p / jnp.sum(p, axis=-1, keepdims=True)
        out = out + (p @ v[:, sl]) @ out_wT[sl, :]
    return out + out_b


def _ref_layer(x, mem, amask, smask, p, nheads):
    tgt_norm = _layer_norm(x, p['n1w'], p['n1b'], 1e-5)
    sa = _mha_ref(tgt_norm, tgt_norm, tgt_norm, p['sa_inwT'], p['sa_inb'],
                  p['sa_owT'], p['sa_ob'], amask, nheads)
    x = x + sa
    xq = _layer_norm(x, p['n2w'], p['n2b'], 1e-5)
    ca = _mha_ref(xq, mem, mem, p['ca_inwT'], p['ca_inb'],
                  p['ca_owT'], p['ca_ob'], smask, nheads)
    x3 = x + ca
    xn = _layer_norm(x3, p['f_lnw'], p['f_lnb'], 1e-6)
    h = jnp.maximum(jnp.dot(xn, p['f_w1T']) + p['f_b1'], 0.0)
    return jnp.dot(h, p['f_w2T']) + p['f_b2'] + x3


def ref_forward(params, trg_embed, encoder_output, attn_mask, src_mask):
    t, b, d = trg_embed.shape
    x = trg_embed + params['pe'][:, :b]
    x_btd = jnp.transpose(x, (1, 0, 2))
    mem_bsd = jnp.transpose(encoder_output, (1, 0, 2))

    def per_batch(xb, mb):
        yb = xb
        for lp in params['layers']:          # faithful: same xb fed to every layer
            yb = _ref_layer(xb, mb, attn_mask, src_mask, lp, NUM_HEADS)
        yn = _layer_norm(yb, params['lnw'], params['lnb'], 1e-6)
        return jnp.dot(yn, params['woutT'])

    out = jax.vmap(per_batch)(x_btd, mem_bsd)
    return jnp.transpose(out, (1, 0, 2))


# ---------------- main ----------------
if __name__ == "__main__":
    key = jax.random.PRNGKey(0)
    k1, k2, k3 = jax.random.split(key, 3)
    trg_embed = jax.random.normal(k1, (T, B, D_MODEL), jnp.float32)
    encoder_output = jax.random.normal(k2, (S, B, D_MODEL), jnp.float32)
    # additive float masks (as accepted by nn.MultiheadAttention):
    attn_mask = jnp.where(jnp.arange(T)[:, None] >= jnp.arange(T)[None, :],
                          0.0, -1e9).astype(jnp.float32)        # causal (T, T)
    src_mask = jnp.zeros((T, S), jnp.float32)                    # no memory masking

    params = init_params(k3)

    out = transformer_decoder_forward(params, trg_embed, encoder_output, attn_mask, src_mask)
    out = jax.block_until_ready(out)

    ref = ref_forward(params, trg_embed, encoder_output, attn_mask, src_mask)
    assert out.shape == (T, B, VOCAB), out.shape
    max_err = float(jnp.max(jnp.abs(out - ref)))
    assert jnp.allclose(out, ref, atol=1e-2, rtol=1e-2), f"max abs err {max_err}"
    print("KERNEL_OK")
</pallas_src>

<mosaic_0001>
module attributes {stable_mosaic.version = 11 : i64} {
  func.func @_fused_decoder_kernel(%arg0: memref<16x32xf32, #tpu.memory_space<vmem>>, %arg1: memref<16x32xf32, #tpu.memory_space<vmem>>, %arg2: memref<8x8xf32, #tpu.memory_space<vmem>>, %arg3: memref<8x8xf32, #tpu.memory_space<vmem>>, %arg4: memref<1x32xf32, #tpu.memory_space<vmem>>, %arg5: memref<1x32xf32, #tpu.memory_space<vmem>>, %arg6: memref<32x96xf32, #tpu.memory_space<vmem>>, %arg7: memref<1x96xf32, #tpu.memory_space<vmem>>, %arg8: memref<32x32xf32, #tpu.memory_space<vmem>>, %arg9: memref<1x32xf32, #tpu.memory_space<vmem>>, %arg10: memref<1x32xf32, #tpu.memory_space<vmem>>, %arg11: memref<1x32xf32, #tpu.memory_space<vmem>>, %arg12: memref<32x96xf32, #tpu.memory_space<vmem>>, %arg13: memref<1x96xf32, #tpu.memory_space<vmem>>, %arg14: memref<32x32xf32, #tpu.memory_space<vmem>>, %arg15: memref<1x32xf32, #tpu.memory_space<vmem>>, %arg16: memref<1x32xf32, #tpu.memory_space<vmem>>, %arg17: memref<1x32xf32, #tpu.memory_space<vmem>>, %arg18: memref<32x64xf32, #tpu.memory_space<vmem>>, %arg19: memref<1x64xf32, #tpu.memory_space<vmem>>, %arg20: memref<64x32xf32, #tpu.memory_space<vmem>>, %arg21: memref<1x32xf32, #tpu.memory_space<vmem>>, %arg22: memref<1x32xf32, #tpu.memory_space<vmem>>, %arg23: memref<1x32xf32, #tpu.memory_space<vmem>>, %arg24: memref<32x128xf32, #tpu.memory_space<vmem>>, %arg25: memref<16x128xf32, #tpu.memory_space<vmem>>) attributes {dimension_semantics = [], scalar_prefetch = 0 : i64, scratch_operands = 0 : i64, tpu.core_type = #tpu.core_type<tc>} {
    %c0 = arith.constant 0 : index
    %c0_0 = arith.constant 0 : index
    %0 = vector.load %arg0[%c0, %c0_0] : memref<16x32xf32, #tpu.memory_space<vmem>>, vector<16x32xf32>
    %c0_1 = arith.constant 0 : index
    %c0_2 = arith.constant 0 : index
    %1 = vector.load %arg1[%c0_1, %c0_2] : memref<16x32xf32, #tpu.memory_space<vmem>>, vector<16x32xf32>
    %c0_3 = arith.constant 0 : index
    %c0_4 = arith.constant 0 : index
    %2 = vector.load %arg2[%c0_3, %c0_4] : memref<8x8xf32, #tpu.memory_space<vmem>>, vector<8x8xf32>
    %c0_5 = arith.constant 0 : index
    %c0_6 = arith.constant 0 : index
    %3 = vector.load %arg3[%c0_5, %c0_6] : memref<8x8xf32, #tpu.memory_space<vmem>>, vector<8x8xf32>
    %c0_7 = arith.constant 0 : index
    %c0_8 = arith.constant 0 : index
    %4 = vector.load %arg4[%c0_7, %c0_8] : memref<1x32xf32, #tpu.memory_space<vmem>>, vector<1x32xf32>
    %c0_9 = arith.constant 0 : index
    %c0_10 = arith.constant 0 : index
    %5 = vector.load %arg5[%c0_9, %c0_10] : memref<1x32xf32, #tpu.memory_space<vmem>>, vector<1x32xf32>
    %cst = arith.constant dense<0.000000e+00> : vector<16xf32>
    %6 = vector.multi_reduction <add>, %0, %cst [1] : vector<16x32xf32> to vector<16xf32>
    %7 = vector.shape_cast %6 : vector<16xf32> to vector<16x1xf32>
    %cst_11 = arith.constant 3.200000e+01 : f32
    %8 = vector.broadcast %cst_11 : f32 to vector<16x1xf32>
    %9 = arith.divf %7, %8 : vector<16x1xf32>
    %10 = vector.broadcast %9 : vector<16x1xf32> to vector<16x32xf32>
    %11 = arith.subf %0, %10 : vector<16x32xf32>
    %12 = arith.mulf %11, %11 : vector<16x32xf32>
    %cst_12 = arith.constant dense<0.000000e+00> : vector<16xf32>
    %13 = vector.multi_reduction <add>, %12, %cst_12 [1] : vector<16x32xf32> to vector<16xf32>
    %14 = vector.shape_cast %13 : vector<16xf32> to vector<16x1xf32>
    %cst_13 = arith.constant 3.200000e+01 : f32
    %15 = vector.broadcast %cst_13 : f32 to vector<16x1xf32>
    %16 = arith.divf %14, %15 : vector<16x1xf32>
    %17 = vector.broadcast %9 : vector<16x1xf32> to vector<16x32xf32>
    %18 = arith.subf %0, %17 : vector<16x32xf32>
    %cst_14 = arith.constant 9.99999974E-6 : f32
    %19 = vector.broadcast %cst_14 : f32 to vector<16x1xf32>
    %20 = arith.addf %16, %19 : vector<16x1xf32>
    %21 = math.rsqrt %20 : vector<16x1xf32>
    %22 = vector.broadcast %21 : vector<16x1xf32> to vector<16x32xf32>
    %23 = arith.mulf %18, %22 : vector<16x32xf32>
    %24 = vector.broadcast %4 : vector<1x32xf32> to vector<16x32xf32>
    %25 = arith.mulf %23, %24 : vector<16x32xf32>
    %26 = vector.broadcast %5 : vector<1x32xf32> to vector<16x32xf32>
    %27 = arith.addf %25, %26 : vector<16x32xf32>
    %c0_15 = arith.constant 0 : index
    %c0_16 = arith.constant 0 : index
    %28 = vector.load %arg6[%c0_15, %c0_16] : memref<32x96xf32, #tpu.memory_space<vmem>>, vector<32x96xf32>
    %c0_17 = arith.constant 0 : index
    %c0_18 = arith.constant 0 : index
    %29 = vector.load %arg7[%c0_17, %c0_18] : memref<1x96xf32, #tpu.memory_space<vmem>>, vector<1x96xf32>
    %c0_19 = arith.constant 0 : index
    %c0_20 = arith.constant 0 : index
    %30 = vector.load %arg8[%c0_19, %c0_20] : memref<32x32xf32, #tpu.memory_space<vmem>>, vector<32x32xf32>
    %c0_21 = arith.constant 0 : index
    %c0_22 = arith.constant 0 : index
    %31 = vector.load %arg9[%c0_21, %c0_22] : memref<1x32xf32, #tpu.memory_space<vmem>>, vector<1x32xf32>
    %cst_23 = arith.constant dense<0.000000e+00> : vector<16x96xf32>
    %32 = tpu.matmul %27, %28, %cst_23 {dimension_numbers = #tpu.dot_dimension_numbers<[1], [0], [0], [1], [0, 0, 1, 1], [], []>} : vector<16x32xf32>, vector<32x96xf32>, vector<16x96xf32> -> vector<16x96xf32>
    %33 = vector.broadcast %29 : vector<1x96xf32> to vector<16x96xf32>
    %34 = arith.addf %32, %33 : vector<16x96xf32>
    %35 = vector.extract_strided_slice %34 {offsets = [0, 0], sizes = [16, 32], strides = [1, 1]} : vector<16x96xf32> to vector<16x32xf32>
    %36 = vector.extract_strided_slice %34 {offsets = [0, 32], sizes = [16, 64], strides = [1, 1]} : vector<16x96xf32> to vector<16x64xf32>
    %37 = vector.extract_strided_slice %35 {offsets = [0, 0], sizes = [8, 32], strides = [1, 1]} : vector<16x32xf32> to vector<8x32xf32>
    %38 = vector.extract_strided_slice %36 {offsets = [0, 0], sizes = [8, 32], strides = [1, 1]} : vector<16x64xf32> to vector<8x32xf32>
    %39 = vector.extract_strided_slice %36 {offsets = [0, 32], sizes = [8, 32], strides = [1, 1]} : vector<16x64xf32> to vector<8x32xf32>
    %40 = vector.extract_strided_slice %37 {offsets = [0, 0], sizes = [8, 8], strides = [1, 1]} : vector<8x32xf32> to vector<8x8xf32>
    %41 = vector.extract_strided_slice %38 {offsets = [0, 0], sizes = [8, 8], strides = [1, 1]} : vector<8x32xf32> to vector<8x8xf32>
    %cst_24 = arith.constant dense<0.000000e+00> : vector<8x8xf32>
    %42 = tpu.matmul %40, %41, %cst_24 {dimension_numbers = #tpu.dot_dimension_numbers<[1], [1], [0], [0], [0, 0, 1, 0], [], []>} : vector<8x8xf32>, vector<8x8xf32>, vector<8x8xf32> -> vector<8x8xf32>
    %43 = arith.addf %42, %2 : vector<8x8xf32>
    %cst_25 = arith.constant dense<0xFF800000> : vector<8xf32>
    %44 = vector.multi_reduction <maximumf>, %43, %cst_25 [1] : vector<8x8xf32> to vector<8xf32>
    %45 = vector.shape_cast %44 : vector<8xf32> to vector<8x1xf32>
    %46 = vector.broadcast %45 : vector<8x1xf32> to vector<8x8xf32>
    %47 = arith.subf %43, %46 : vector<8x8xf32>
    %48 = math.exp %47 : vector<8x8xf32>
    %cst_26 = arith.constant dense<0.000000e+00> : vector<8xf32>
    %49 = vector.multi_reduction <add>, %48, %cst_26 [1] : vector<8x8xf32> to vector<8xf32>
    %50 = vector.shape_cast %49 : vector<8xf32> to vector<8x1xf32>
    %51 = tpu.reciprocal %50 {approx = true} : vector<8x1xf32> -> vector<8x1xf32>
    %52 = vector.broadcast %51 : vector<8x1xf32> to vector<8x8xf32>
    %53 = arith.mulf %48, %52 : vector<8x8xf32>
    %54 = vector.extract_strided_slice %39 {offsets = [0, 0], sizes = [8, 8], strides = [1, 1]} : vector<8x32xf32> to vector<8x8xf32>
    %cst_27 = arith.constant dense<0.000000e+00> : vector<8x8xf32>
    %55 = tpu.matmul %53, %54, %cst_27 {dimension_numbers = #tpu.dot_dimension_numbers<[1], [0], [0], [1], [0, 0, 1, 1], [], []>} : vector<8x8xf32>, vector<8x8xf32>, vector<8x8xf32> -> vector<8x8xf32>
    %56 = vector.extract_strided_slice %37 {offsets = [0, 8], sizes = [8, 8], strides = [1, 1]} : vector<8x32xf32> to vector<8x8xf32>
    %57 = vector.extract_strided_slice %38 {offsets = [0, 8], sizes = [8, 8], strides = [1, 1]} : vector<8x32xf32> to vector<8x8xf32>
    %cst_28 = arith.constant dense<0.000000e+00> : vector<8x8xf32>
    %58 = tpu.matmul %56, %57, %cst_28 {dimension_numbers = #tpu.dot_dimension_numbers<[1], [1], [0], [0], [0, 0, 1, 0], [], []>} : vector<8x8xf32>, vector<8x8xf32>, vector<8x8xf32> -> vector<8x8xf32>
    %59 = arith.addf %58, %2 : vector<8x8xf32>
    %cst_29 = arith.constant dense<0xFF800000> : vector<8xf32>
    %60 = vector.multi_reduction <maximumf>, %59, %cst_29 [1] : vector<8x8xf32> to vector<8xf32>
    %61 = vector.shape_cast %60 : vector<8xf32> to vector<8x1xf32>
    %62 = vector.broadcast %61 : vector<8x1xf32> to vector<8x8xf32>
    %63 = arith.subf %59, %62 : vector<8x8xf32>
    %64 = math.exp %63 : vector<8x8xf32>
    %cst_30 = arith.constant dense<0.000000e+00> : vector<8xf32>
    %65 = vector.multi_reduction <add>, %64, %cst_30 [1] : vector<8x8xf32> to vector<8xf32>
    %66 = vector.shape_cast %65 : vector<8xf32> to vector<8x1xf32>
    %67 = tpu.reciprocal %66 {approx = true} : vector<8x1xf32> -> vector<8x1xf32>
    %68 = vector.broadcast %67 : vector<8x1xf32> to vector<8x8xf32>
    %69 = arith.mulf %64, %68 : vector<8x8xf32>
    %70 = vector.extract_strided_slice %39 {offsets = [0, 8], sizes = [8, 8], strides = [1, 1]} : vector<8x32xf32> to vector<8x8xf32>
    %cst_31 = arith.constant dense<0.000000e+00> : vector<8x8xf32>
    %71 = tpu.matmul %69, %70, %cst_31 {dimension_numbers = #tpu.dot_dimension_numbers<[1], [0], [0], [1], [0, 0, 1, 1], [], []>} : vector<8x8xf32>, vector<8x8xf32>, vector<8x8xf32> -> vector<8x8xf32>
    %72 = vector.extract_strided_slice %37 {offsets = [0, 16], sizes = [8, 8], strides = [1, 1]} : vector<8x32xf32> to vector<8x8xf32>
    %73 = vector.extract_strided_slice %38 {offsets = [0, 16], sizes = [8, 8], strides = [1, 1]} : vector<8x32xf32> to vector<8x8xf32>
    %cst_32 = arith.constant dense<0.000000e+00> : vector<8x8xf32>
    %74 = tpu.matmul %72, %73, %cst_32 {dimension_numbers = #tpu.dot_dimension_numbers<[1], [1], [0], [0], [0, 0, 1, 0], [], []>} : vector<8x8xf32>, vector<8x8xf32>, vector<8x8xf32> -> vector<8x8xf32>
    %75 = arith.addf %74, %2 : vector<8x8xf32>
    %cst_33 = arith.constant dense<0xFF800000> : vector<8xf32>
    %76 = vector.multi_reduction <maximumf>, %75, %cst_33 [1] : vector<8x8xf32> to vector<8xf32>
    %77 = vector.shape_cast %76 : vector<8xf32> to vector<8x1xf32>
    %78 = vector.broadcast %77 : vector<8x1xf32> to vector<8x8xf32>
    %79 = arith.subf %75, %78 : vector<8x8xf32>
    %80 = math.exp %79 : vector<8x8xf32>
    %cst_34 = arith.constant dense<0.000000e+00> : vector<8xf32>
    %81 = vector.multi_reduction <add>, %80, %cst_34 [1] : vector<8x8xf32> to vector<8xf32>
    %82 = vector.shape_cast %81 : vector<8xf32> to vector<8x1xf32>
    %83 = tpu.reciprocal %82 {approx = true} : vector<8x1xf32> -> vector<8x1xf32>
    %84 = vector.broadcast %83 : vector<8x1xf32> to vector<8x8xf32>
    %85 = arith.mulf %80, %84 : vector<8x8xf32>
    %86 = vector.extract_strided_slice %39 {offsets = [0, 16], sizes = [8, 8], strides = [1, 1]} : vector<8x32xf32> to vector<8x8xf32>
    %cst_35 = arith.constant dense<0.000000e+00> : vector<8x8xf32>
    %87 = tpu.matmul %85, %86, %cst_35 {dimension_numbers = #tpu.dot_dimension_numbers<[1], [0], [0], [1], [0, 0, 1, 1], [], []>} : vector<8x8xf32>, vector<8x8xf32>, vector<8x8xf32> -> vector<8x8xf32>
    %88 = vector.extract_strided_slice %37 {offsets = [0, 24], sizes = [8, 8], strides = [1, 1]} : vector<8x32xf32> to vector<8x8xf32>
    %89 = vector.extract_strided_slice %38 {offsets = [0, 24], sizes = [8, 8], strides = [1, 1]} : vector<8x32xf32> to vector<8x8xf32>
    %cst_36 = arith.constant dense<0.000000e+00> : vector<8x8xf32>
    %90 = tpu.matmul %88, %89, %cst_36 {dimension_numbers = #tpu.dot_dimension_numbers<[1], [1], [0], [0], [0, 0, 1, 0], [], []>} : vector<8x8xf32>, vector<8x8xf32>, vector<8x8xf32> -> vector<8x8xf32>
    %91 = arith.addf %90, %2 : vector<8x8xf32>
    %cst_37 = arith.constant dense<0xFF800000> : vector<8xf32>
    %92 = vector.multi_reduction <maximumf>, %91, %cst_37 [1] : vector<8x8xf32> to vector<8xf32>
    %93 = vector.shape_cast %92 : vector<8xf32> to vector<8x1xf32>
    %94 = vector.broadcast %93 : vector<8x1xf32> to vector<8x8xf32>
    %95 = arith.subf %91, %94 : vector<8x8xf32>
    %96 = math.exp %95 : vector<8x8xf32>
    %cst_38 = arith.constant dense<0.000000e+00> : vector<8xf32>
    %97 = vector.multi_reduction <add>, %96, %cst_38 [1] : vector<8x8xf32> to vector<8xf32>
    %98 = vector.shape_cast %97 : vector<8xf32> to vector<8x1xf32>
    %99 = tpu.reciprocal %98 {approx = true} : vector<8x1xf32> -> vector<8x1xf32>
    %100 = vector.broadcast %99 : vector<8x1xf32> to vector<8x8xf32>
    %101 = arith.mulf %96, %100 : vector<8x8xf32>
    %102 = vector.extract_strided_slice %39 {offsets = [0, 24], sizes = [8, 8], strides = [1, 1]} : vector<8x32xf32> to vector<8x8xf32>
    %cst_39 = arith.constant dense<0.000000e+00> : vector<8x8xf32>
    %103 = tpu.matmul %101, %102, %cst_39 {dimension_numbers = #tpu.dot_dimension_numbers<[1], [0], [0], [1], [0, 0, 1, 1], [], []>} : vector<8x8xf32>, vector<8x8xf32>, vector<8x8xf32> -> vector<8x8xf32>
    %104 = tpu.concatenate %55, %71, %87, %103 in 1 : vector<8x8xf32>, vector<8x8xf32>, vector<8x8xf32>, vector<8x8xf32> -> vector<8x32xf32>
    %105 = vector.extract_strided_slice %35 {offsets = [8, 0], sizes = [8, 32], strides = [1, 1]} : vector<16x32xf32> to vector<8x32xf32>
    %106 = vector.extract_strided_slice %36 {offsets = [8, 0], sizes = [8, 32], strides = [1, 1]} : vector<16x64xf32> to vector<8x32xf32>
    %107 = vector.extract_strided_slice %36 {offsets = [8, 32], sizes = [8, 32], strides = [1, 1]} : vector<16x64xf32> to vector<8x32xf32>
    %108 = vector.extract_strided_slice %105 {offsets = [0, 0], sizes = [8, 8], strides = [1, 1]} : vector<8x32xf32> to vector<8x8xf32>
    %109 = vector.extract_strided_slice %106 {offsets = [0, 0], sizes = [8, 8], strides = [1, 1]} : vector<8x32xf32> to vector<8x8xf32>
    %cst_40 = arith.constant dense<0.000000e+00> : vector<8x8xf32>
    %110 = tpu.matmul %108, %109, %cst_40 {dimension_numbers = #tpu.dot_dimension_numbers<[1], [1], [0], [0], [0, 0, 1, 0], [], []>} : vector<8x8xf32>, vector<8x8xf32>, vector<8x8xf32> -> vector<8x8xf32>
    %111 = arith.addf %110, %2 : vector<8x8xf32>
    %cst_41 = arith.constant dense<0xFF800000> : vector<8xf32>
    %112 = vector.multi_reduction <maximumf>, %111, %cst_41 [1] : vector<8x8xf32> to vector<8xf32>
    %113 = vector.shape_cast %112 : vector<8xf32> to vector<8x1xf32>
    %114 = vector.broadcast %113 : vector<8x1xf32> to vector<8x8xf32>
    %115 = arith.subf %111, %114 : vector<8x8xf32>
    %116 = math.exp %115 : vector<8x8xf32>
    %cst_42 = arith.constant dense<0.000000e+00> : vector<8xf32>
    %117 = vector.multi_reduction <add>, %116, %cst_42 [1] : vector<8x8xf32> to vector<8xf32>
    %118 = vector.shape_cast %117 : vector<8xf32> to vector<8x1xf32>
    %119 = tpu.reciprocal %118 {approx = true} : vector<8x1xf32> -> vector<8x1xf32>
    %120 = vector.broadcast %119 : vector<8x1xf32> to vector<8x8xf32>
    %121 = arith.mulf %116, %120 : vector<8x8xf32>
    %122 = vector.extract_strided_slice %107 {offsets = [0, 0], sizes = [8, 8], strides = [1, 1]} : vector<8x32xf32> to vector<8x8xf32>
    %cst_43 = arith.constant dense<0.000000e+00> : vector<8x8xf32>
    %123 = tpu.matmul %121, %122, %cst_43 {dimension_numbers = #tpu.dot_dimension_numbers<[1], [0], [0], [1], [0, 0, 1, 1], [], []>} : vector<8x8xf32>, vector<8x8xf32>, vector<8x8xf32> -> vector<8x8xf32>
    %124 = vector.extract_strided_slice %105 {offsets = [0, 8], sizes = [8, 8], strides = [1, 1]} : vector<8x32xf32> to vector<8x8xf32>
    %125 = vector.extract_strided_slice %106 {offsets = [0, 8], sizes = [8, 8], strides = [1, 1]} : vector<8x32xf32> to vector<8x8xf32>
    %cst_44 = arith.constant dense<0.000000e+00> : vector<8x8xf32>
    %126 = tpu.matmul %124, %125, %cst_44 {dimension_numbers = #tpu.dot_dimension_numbers<[1], [1], [0], [0], [0, 0, 1, 0], [], []>} : vector<8x8xf32>, vector<8x8xf32>, vector<8x8xf32> -> vector<8x8xf32>
    %127 = arith.addf %126, %2 : vector<8x8xf32>
    %cst_45 = arith.constant dense<0xFF800000> : vector<8xf32>
    %128 = vector.multi_reduction <maximumf>, %127, %cst_45 [1] : vector<8x8xf32> to vector<8xf32>
    %129 = vector.shape_cast %128 : vector<8xf32> to vector<8x1xf32>
    %130 = vector.broadcast %129 : vector<8x1xf32> to vector<8x8xf32>
    %131 = arith.subf %127, %130 : vector<8x8xf32>
    %132 = math.exp %131 : vector<8x8xf32>
    %cst_46 = arith.constant dense<0.000000e+00> : vector<8xf32>
    %133 = vector.multi_reduction <add>, %132, %cst_46 [1] : vector<8x8xf32> to vector<8xf32>
    %134 = vector.shape_cast %133 : vector<8xf32> to vector<8x1xf32>
    %135 = tpu.reciprocal %134 {approx = true} : vector<8x1xf32> -> vector<8x1xf32>
    %136 = vector.broadcast %135 : vector<8x1xf32> to vector<8x8xf32>
    %137 = arith.mulf %132, %136 : vector<8x8xf32>
    %138 = vector.extract_strided_slice %107 {offsets = [0, 8], sizes = [8, 8], strides = [1, 1]} : vector<8x32xf32> to vector<8x8xf32>
    %cst_47 = arith.constant dense<0.000000e+00> : vector<8x8xf32>
    %139 = tpu.matmul %137, %138, %cst_47 {dimension_numbers = #tpu.dot_dimension_numbers<[1], [0], [0], [1], [0, 0, 1, 1], [], []>} : vector<8x8xf32>, vector<8x8xf32>, vector<8x8xf32> -> vector<8x8xf32>
    %140 = vector.extract_strided_slice %105 {offsets = [0, 16], sizes = [8, 8], strides = [1, 1]} : vector<8x32xf32> to vector<8x8xf32>
    %141 = vector.extract_strided_slice %106 {offsets = [0, 16], sizes = [8, 8], strides = [1, 1]} : vector<8x32xf32> to vector<8x8xf32>
    %cst_48 = arith.constant dense<0.000000e+00> : vector<8x8xf32>
    %142 = tpu.matmul %140, %141, %cst_48 {dimension_numbers = #tpu.dot_dimension_numbers<[1], [1], [0], [0], [0, 0, 1, 0], [], []>} : vector<8x8xf32>, vector<8x8xf32>, vector<8x8xf32> -> vector<8x8xf32>
    %143 = arith.addf %142, %2 : vector<8x8xf32>
    %cst_49 = arith.constant dense<0xFF800000> : vector<8xf32>
    %144 = vector.multi_reduction <maximumf>, %143, %cst_49 [1] : vector<8x8xf32> to vector<8xf32>
    %145 = vector.shape_cast %144 : vector<8xf32> to vector<8x1xf32>
    %146 = vector.broadcast %145 : vector<8x1xf32> to vector<8x8xf32>
    %147 = arith.subf %143, %146 : vector<8x8xf32>
    %148 = math.exp %147 : vector<8x8xf32>
    %cst_50 = arith.constant dense<0.000000e+00> : vector<8xf32>
    %149 = vector.multi_reduction <add>, %148, %cst_50 [1] : vector<8x8xf32> to vector<8xf32>
    %150 = vector.shape_cast %149 : vector<8xf32> to vector<8x1xf32>
    %151 = tpu.reciprocal %150 {approx = true} : vector<8x1xf32> -> vector<8x1xf32>
    %152 = vector.broadcast %151 : vector<8x1xf32> to vector<8x8xf32>
    %153 = arith.mulf %148, %152 : vector<8x8xf32>
    %154 = vector.extract_strided_slice %107 {offsets = [0, 16], sizes = [8, 8], strides = [1, 1]} : vector<8x32xf32> to vector<8x8xf32>
    %cst_51 = arith.constant dense<0.000000e+00> : vector<8x8xf32>
    %155 = tpu.matmul %153, %154, %cst_51 {dimension_numbers = #tpu.dot_dimension_numbers<[1], [0], [0], [1], [0, 0, 1, 1], [], []>} : vector<8x8xf32>, vector<8x8xf32>, vector<8x8xf32> -> vector<8x8xf32>
    %156 = vector.extract_strided_slice %105 {offsets = [0, 24], sizes = [8, 8], strides = [1, 1]} : vector<8x32xf32> to vector<8x8xf32>
    %157 = vector.extract_strided_slice %106 {offsets = [0, 24], sizes = [8, 8], strides = [1, 1]} : vector<8x32xf32> to vector<8x8xf32>
    %cst_52 = arith.constant dense<0.000000e+00> : vector<8x8xf32>
    %158 = tpu.matmul %156, %157, %cst_52 {dimension_numbers = #tpu.dot_dimension_numbers<[1], [1], [0], [0], [0, 0, 1, 0], [], []>} : vector<8x8xf32>, vector<8x8xf32>, vector<8x8xf32> -> vector<8x8xf32>
    %159 = arith.addf %158, %2 : vector<8x8xf32>
    %cst_53 = arith.constant dense<0xFF800000> : vector<8xf32>
    %160 = vector.multi_reduction <maximumf>, %159, %cst_53 [1] : vector<8x8xf32> to vector<8xf32>
    %161 = vector.shape_cast %160 : vector<8xf32> to vector<8x1xf32>
    %162 = vector.broadcast %161 : vector<8x1xf32> to vector<8x8xf32>
    %163 = arith.subf %159, %162 : vector<8x8xf32>
    %164 = math.exp %163 : vector<8x8xf32>
    %cst_54 = arith.constant dense<0.000000e+00> : vector<8xf32>
    %165 = vector.multi_reduction <add>, %164, %cst_54 [1] : vector<8x8xf32> to vector<8xf32>
    %166 = vector.shape_cast %165 : vector<8xf32> to vector<8x1xf32>
    %167 = tpu.reciprocal %166 {approx = true} : vector<8x1xf32> -> vector<8x1xf32>
    %168 = vector.broadcast %167 : vector<8x1xf32> to vector<8x8xf32>
    %169 = arith.mulf %164, %168 : vector<8x8xf32>
    %170 = vector.extract_strided_slice %107 {offsets = [0, 24], sizes = [8, 8], strides = [1, 1]} : vector<8x32xf32> to vector<8x8xf32>
    %cst_55 = arith.constant dense<0.000000e+00> : vector<8x8xf32>
    %171 = tpu.matmul %169, %170, %cst_55 {dimension_numbers = #tpu.dot_dimension_numbers<[1], [0], [0], [1], [0, 0, 1, 1], [], []>} : vector<8x8xf32>, vector<8x8xf32>, vector<8x8xf32> -> vector<8x8xf32>
    %172 = tpu.concatenate %123, %139, %155, %171 in 1 : vector<8x8xf32>, vector<8x8xf32>, vector<8x8xf32>, vector<8x8xf32> -> vector<8x32xf32>
    %173 = tpu.concatenate %104, %172 in 0 : vector<8x32xf32>, vector<8x32xf32> -> vector<16x32xf32>
    %cst_56 = arith.constant dense<0.000000e+00> : vector<16x32xf32>
    %174 = tpu.matmul %173, %30, %cst_56 {dimension_numbers = #tpu.dot_dimension_numbers<[1], [0], [0], [1], [0, 0, 1, 1], [], []>} : vector<16x32xf32>, vector<32x32xf32>, vector<16x32xf32> -> vector<16x32xf32>
    %175 = vector.broadcast %31 : vector<1x32xf32> to vector<16x32xf32>
    %176 = arith.addf %174, %175 : vector<16x32xf32>
    %177 = arith.addf %0, %176 : vector<16x32xf32>
    %c0_57 = arith.constant 0 : index
    %c0_58 = arith.constant 0 : index
    %178 = vector.load %arg10[%c0_57, %c0_58] : memref<1x32xf32, #tpu.memory_space<vmem>>, vector<1x32xf32>
    %c0_59 = arith.constant 0 : index
    %c0_60 = arith.constant 0 : index
    %179 = vector.load %arg11[%c0_59, %c0_60] : memref<1x32xf32, #tpu.memory_space<vmem>>, vector<1x32xf32>
    %cst_61 = arith.constant dense<0.000000e+00> : vector<16xf32>
    %180 = vector.multi_reduction <add>, %177, %cst_61 [1] : vector<16x32xf32> to vector<16xf32>
    %181 = vector.shape_cast %180 : vector<16xf32> to vector<16x1xf32>
    %cst_62 = arith.constant 3.200000e+01 : f32
    %182 = vector.broadcast %cst_62 : f32 to vector<16x1xf32>
    %183 = arith.divf %181, %182 : vector<16x1xf32>
    %184 = vector.broadcast %183 : vector<16x1xf32> to vector<16x32xf32>
    %185 = arith.subf %177, %184 : vector<16x32xf32>
    %186 = arith.mulf %185, %185 : vector<16x32xf32>
    %cst_63 = arith.constant dense<0.000000e+00> : vector<16xf32>
    %187 = vector.multi_reduction <add>, %186, %cst_63 [1] : vector<16x32xf32> to vector<16xf32>
    %188 = vector.shape_cast %187 : vector<16xf32> to vector<16x1xf32>
    %cst_64 = arith.constant 3.200000e+01 : f32
    %189 = vector.broadcast %cst_64 : f32 to vector<16x1xf32>
    %190 = arith.divf %188, %189 : vector<16x1xf32>
    %191 = vector.broadcast %183 : vector<16x1xf32> to vector<16x32xf32>
    %192 = arith.subf %177, %191 : vector<16x32xf32>
    %cst_65 = arith.constant 9.99999974E-6 : f32
    %193 = vector.broadcast %cst_65 : f32 to vector<16x1xf32>
    %194 = arith.addf %190, %193 : vector<16x1xf32>
    %195 = math.rsqrt %194 : vector<16x1xf32>
    %196 = vector.broadcast %195 : vector<16x1xf32> to vector<16x32xf32>
    %197 = arith.mulf %192, %196 : vector<16x32xf32>
    %198 = vector.broadcast %178 : vector<1x32xf32> to vector<16x32xf32>
    %199 = arith.mulf %197, %198 : vector<16x32xf32>
    %200 = vector.broadcast %179 : vector<1x32xf32> to vector<16x32xf32>
    %201 = arith.addf %199, %200 : vector<16x32xf32>
    %c0_66 = arith.constant 0 : index
    %c0_67 = arith.constant 0 : index
    %202 = vector.load %arg12[%c0_66, %c0_67] : memref<32x96xf32, #tpu.memory_space<vmem>>, vector<32x96xf32>
    %c0_68 = arith.constant 0 : index
    %c0_69 = arith.constant 0 : index
    %203 = vector.load %arg13[%c0_68, %c0_69] : memref<1x96xf32, #tpu.memory_space<vmem>>, vector<1x96xf32>
    %c0_70 = arith.constant 0 : index
    %c0_71 = arith.constant 0 : index
    %204 = vector.load %arg14[%c0_70, %c0_71] : memref<32x32xf32, #tpu.memory_space<vmem>>, vector<32x32xf32>
    %c0_72 = arith.constant 0 : index
    %c0_73 = arith.constant 0 : index
    %205 = vector.load %arg15[%c0_72, %c0_73] : memref<1x32xf32, #tpu.memory_space<vmem>>, vector<1x32xf32>
    %206 = vector.extract_strided_slice %202 {offsets = [0, 0], sizes = [32, 32], strides = [1, 1]} : vector<32x96xf32> to vector<32x32xf32>
    %cst_74 = arith.constant dense<0.000000e+00> : vector<16x32xf32>
    %207 = tpu.matmul %201, %206, %cst_74 {dimension_numbers = #tpu.dot_dimension_numbers<[1], [0], [0], [1], [0, 0, 1, 1], [], []>} : vector<16x32xf32>, vector<32x32xf32>, vector<16x32xf32> -> vector<16x32xf32>
    %208 = vector.extract_strided_slice %203 {offsets = [0, 0], sizes = [1, 32], strides = [1, 1]} : vector<1x96xf32> to vector<1x32xf32>
    %209 = vector.broadcast %208 : vector<1x32xf32> to vector<16x32xf32>
    %210 = arith.addf %207, %209 : vector<16x32xf32>
    %211 = vector.extract_strided_slice %202 {offsets = [0, 32], sizes = [32, 64], strides = [1, 1]} : vector<32x96xf32> to vector<32x64xf32>
    %cst_75 = arith.constant dense<0.000000e+00> : vector<16x64xf32>
    %212 = tpu.matmul %1, %211, %cst_75 {dimension_numbers = #tpu.dot_dimension_numbers<[1], [0], [0], [1], [0, 0, 1, 1], [], []>} : vector<16x32xf32>, vector<32x64xf32>, vector<16x64xf32> -> vector<16x64xf32>
    %213 = vector.extract_strided_slice %203 {offsets = [0, 32], sizes = [1, 64], strides = [1, 1]} : vector<1x96xf32> to vector<1x64xf32>
    %214 = vector.broadcast %213 : vector<1x64xf32> to vector<16x64xf32>
    %215 = arith.addf %212, %214 : vector<16x64xf32>
    %216 = vector.extract_strided_slice %210 {offsets = [0, 0], sizes = [8, 32], strides = [1, 1]} : vector<16x32xf32> to vector<8x32xf32>
    %217 = vector.extract_strided_slice %215 {offsets = [0, 0], sizes = [8, 32], strides = [1, 1]} : vector<16x64xf32> to vector<8x32xf32>
    %218 = vector.extract_strided_slice %215 {offsets = [0, 32], sizes = [8, 32], strides = [1, 1]} : vector<16x64xf32> to vector<8x32xf32>
    %219 = vector.extract_strided_slice %216 {offsets = [0, 0], sizes = [8, 8], strides = [1, 1]} : vector<8x32xf32> to vector<8x8xf32>
    %220 = vector.extract_strided_slice %217 {offsets = [0, 0], sizes = [8, 8], strides = [1, 1]} : vector<8x32xf32> to vector<8x8xf32>
    %cst_76 = arith.constant dense<0.000000e+00> : vector<8x8xf32>
    %221 = tpu.matmul %219, %220, %cst_76 {dimension_numbers = #tpu.dot_dimension_numbers<[1], [1], [0], [0], [0, 0, 1, 0], [], []>} : vector<8x8xf32>, vector<8x8xf32>, vector<8x8xf32> -> vector<8x8xf32>
    %222 = arith.addf %221, %3 : vector<8x8xf32>
    %cst_77 = arith.constant dense<0xFF800000> : vector<8xf32>
    %223 = vector.multi_reduction <maximumf>, %222, %cst_77 [1] : vector<8x8xf32> to vector<8xf32>
    %224 = vector.shape_cast %223 : vector<8xf32> to vector<8x1xf32>
    %225 = vector.broadcast %224 : vector<8x1xf32> to vector<8x8xf32>
    %226 = arith.subf %222, %225 : vector<8x8xf32>
    %227 = math.exp %226 : vector<8x8xf32>
    %cst_78 = arith.constant dense<0.000000e+00> : vector<8xf32>
    %228 = vector.multi_reduction <add>, %227, %cst_78 [1] : vector<8x8xf32> to vector<8xf32>
    %229 = vector.shape_cast %228 : vector<8xf32> to vector<8x1xf32>
    %230 = tpu.reciprocal %229 {approx = true} : vector<8x1xf32> -> vector<8x1xf32>
    %231 = vector.broadcast %230 : vector<8x1xf32> to vector<8x8xf32>
    %232 = arith.mulf %227, %231 : vector<8x8xf32>
    %233 = vector.extract_strided_slice %218 {offsets = [0, 0], sizes = [8, 8], strides = [1, 1]} : vector<8x32xf32> to vector<8x8xf32>
    %cst_79 = arith.constant dense<0.000000e+00> : vector<8x8xf32>
    %234 = tpu.matmul %232, %233, %cst_79 {dimension_numbers = #tpu.dot_dimension_numbers<[1], [0], [0], [1], [0, 0, 1, 1], [], []>} : vector<8x8xf32>, vector<8x8xf32>, vector<8x8xf32> -> vector<8x8xf32>
    %235 = vector.extract_strided_slice %216 {offsets = [0, 8], sizes = [8, 8], strides = [1, 1]} : vector<8x32xf32> to vector<8x8xf32>
    %236 = vector.extract_strided_slice %217 {offsets = [0, 8], sizes = [8, 8], strides = [1, 1]} : vector<8x32xf32> to vector<8x8xf32>
    %cst_80 = arith.constant dense<0.000000e+00> : vector<8x8xf32>
    %237 = tpu.matmul %235, %236, %cst_80 {dimension_numbers = #tpu.dot_dimension_numbers<[1], [1], [0], [0], [0, 0, 1, 0], [], []>} : vector<8x8xf32>, vector<8x8xf32>, vector<8x8xf32> -> vector<8x8xf32>
    %238 = arith.addf %237, %3 : vector<8x8xf32>
    %cst_81 = arith.constant dense<0xFF800000> : vector<8xf32>
    %239 = vector.multi_reduction <maximumf>, %238, %cst_81 [1] : vector<8x8xf32> to vector<8xf32>
    %240 = vector.shape_cast %239 : vector<8xf32> to vector<8x1xf32>
    %241 = vector.broadcast %240 : vector<8x1xf32> to vector<8x8xf32>
    %242 = arith.subf %238, %241 : vector<8x8xf32>
    %243 = math.exp %242 : vector<8x8xf32>
    %cst_82 = arith.constant dense<0.000000e+00> : vector<8xf32>
    %244 = vector.multi_reduction <add>, %243, %cst_82 [1] : vector<8x8xf32> to vector<8xf32>
    %245 = vector.shape_cast %244 : vector<8xf32> to vector<8x1xf32>
    %246 = tpu.reciprocal %245 {approx = true} : vector<8x1xf32> -> vector<8x1xf32>
    %247 = vector.broadcast %246 : vector<8x1xf32> to vector<8x8xf32>
    %248 = arith.mulf %243, %247 : vector<8x8xf32>
    %249 = vector.extract_strided_slice %218 {offsets = [0, 8], sizes = [8, 8], strides = [1, 1]} : vector<8x32xf32> to vector<8x8xf32>
    %cst_83 = arith.constant dense<0.000000e+00> : vector<8x8xf32>
    %250 = tpu.matmul %248, %249, %cst_83 {dimension_numbers = #tpu.dot_dimension_numbers<[1], [0], [0], [1], [0, 0, 1, 1], [], []>} : vector<8x8xf32>, vector<8x8xf32>, vector<8x8xf32> -> vector<8x8xf32>
    %251 = vector.extract_strided_slice %216 {offsets = [0, 16], sizes = [8, 8], strides = [1, 1]} : vector<8x32xf32> to vector<8x8xf32>
    %252 = vector.extract_strided_slice %217 {offsets = [0, 16], sizes = [8, 8], strides = [1, 1]} : vector<8x32xf32> to vector<8x8xf32>
    %cst_84 = arith.constant dense<0.000000e+00> : vector<8x8xf32>
    %253 = tpu.matmul %251, %252, %cst_84 {dimension_numbers = #tpu.dot_dimension_numbers<[1], [1], [0], [0], [0, 0, 1, 0], [], []>} : vector<8x8xf32>, vector<8x8xf32>, vector<8x8xf32> -> vector<8x8xf32>
    %254 = arith.addf %253, %3 : vector<8x8xf32>
    %cst_85 = arith.constant dense<0xFF800000> : vector<8xf32>
    %255 = vector.multi_reduction <maximumf>, %254, %cst_85 [1] : vector<8x8xf32> to vector<8xf32>
    %256 = vector.shape_cast %255 : vector<8xf32> to vector<8x1xf32>
    %257 = vector.broadcast %256 : vector<8x1xf32> to vector<8x8xf32>
    %258 = arith.subf %254, %257 : vector<8x8xf32>
    %259 = math.exp %258 : vector<8x8xf32>
    %cst_86 = arith.constant dense<0.000000e+00> : vector<8xf32>
    %260 = vector.multi_reduction <add>, %259, %cst_86 [1] : vector<8x8xf32> to vector<8xf32>
    %261 = vector.shape_cast %260 : vector<8xf32> to vector<8x1xf32>
    %262 = tpu.reciprocal %261 {approx = true} : vector<8x1xf32> -> vector<8x1xf32>
    %263 = vector.broadcast %262 : vector<8x1xf32> to vector<8x8xf32>
    %264 = arith.mulf %259, %263 : vector<8x8xf32>
    %265 = vector.extract_strided_slice %218 {offsets = [0, 16], sizes = [8, 8], strides = [1, 1]} : vector<8x32xf32> to vector<8x8xf32>
    %cst_87 = arith.constant dense<0.000000e+00> : vector<8x8xf32>
    %266 = tpu.matmul %264, %265, %cst_87 {dimension_numbers = #tpu.dot_dimension_numbers<[1], [0], [0], [1], [0, 0, 1, 1], [], []>} : vector<8x8xf32>, vector<8x8xf32>, vector<8x8xf32> -> vector<8x8xf32>
    %267 = vector.extract_strided_slice %216 {offsets = [0, 24], sizes = [8, 8], strides = [1, 1]} : vector<8x32xf32> to vector<8x8xf32>
    %268 = vector.extract_strided_slice %217 {offsets = [0, 24], sizes = [8, 8], strides = [1, 1]} : vector<8x32xf32> to vector<8x8xf32>
    %cst_88 = arith.constant dense<0.000000e+00> : vector<8x8xf32>
    %269 = tpu.matmul %267, %268, %cst_88 {dimension_numbers = #tpu.dot_dimension_numbers<[1], [1], [0], [0], [0, 0, 1, 0], [], []>} : vector<8x8xf32>, vector<8x8xf32>, vector<8x8xf32> -> vector<8x8xf32>
    %270 = arith.addf %269, %3 : vector<8x8xf32>
    %cst_89 = arith.constant dense<0xFF800000> : vector<8xf32>
    %271 = vector.multi_reduction <maximumf>, %270, %cst_89 [1] : vector<8x8xf32> to vector<8xf32>
    %272 = vector.shape_cast %271 : vector<8xf32> to vector<8x1xf32>
    %273 = vector.broadcast %272 : vector<8x1xf32> to vector<8x8xf32>
    %274 = arith.subf %270, %273 : vector<8x8xf32>
    %275 = math.exp %274 : vector<8x8xf32>
    %cst_90 = arith.constant dense<0.000000e+00> : vector<8xf32>
    %276 = vector.multi_reduction <add>, %275, %cst_90 [1] : vector<8x8xf32> to vector<8xf32>
    %277 = vector.shape_cast %276 : vector<8xf32> to vector<8x1xf32>
    %278 = tpu.reciprocal %277 {approx = true} : vector<8x1xf32> -> vector<8x1xf32>
    %279 = vector.broadcast %278 : vector<8x1xf32> to vector<8x8xf32>
    %280 = arith.mulf %275, %279 : vector<8x8xf32>
    %281 = vector.extract_strided_slice %218 {offsets = [0, 24], sizes = [8, 8], strides = [1, 1]} : vector<8x32xf32> to vector<8x8xf32>
    %cst_91 = arith.constant dense<0.000000e+00> : vector<8x8xf32>
    %282 = tpu.matmul %280, %281, %cst_91 {dimension_numbers = #tpu.dot_dimension_numbers<[1], [0], [0], [1], [0, 0, 1, 1], [], []>} : vector<8x8xf32>, vector<8x8xf32>, vector<8x8xf32> -> vector<8x8xf32>
    %283 = tpu.concatenate %234, %250, %266, %282 in 1 : vector<8x8xf32>, vector<8x8xf32>, vector<8x8xf32>, vector<8x8xf32> -> vector<8x32xf32>
    %284 = vector.extract_strided_slice %210 {offsets = [8, 0], sizes = [8, 32], strides = [1, 1]} : vector<16x32xf32> to vector<8x32xf32>
    %285 = vector.extract_strided_slice %215 {offsets = [8, 0], sizes = [8, 32], strides = [1, 1]} : vector<16x64xf32> to vector<8x32xf32>
    %286 = vector.extract_strided_slice %215 {offsets = [8, 32], sizes = [8, 32], strides = [1, 1]} : vector<16x64xf32> to vector<8x32xf32>
    %287 = vector.extract_strided_slice %284 {offsets = [0, 0], sizes = [8, 8], strides = [1, 1]} : vector<8x32xf32> to vector<8x8xf32>
    %288 = vector.extract_strided_slice %285 {offsets = [0, 0], sizes = [8, 8], strides = [1, 1]} : vector<8x32xf32> to vector<8x8xf32>
    %cst_92 = arith.constant dense<0.000000e+00> : vector<8x8xf32>
    %289 = tpu.matmul %287, %288, %cst_92 {dimension_numbers = #tpu.dot_dimension_numbers<[1], [1], [0], [0], [0, 0, 1, 0], [], []>} : vector<8x8xf32>, vector<8x8xf32>, vector<8x8xf32> -> vector<8x8xf32>
    %290 = arith.addf %289, %3 : vector<8x8xf32>
    %cst_93 = arith.constant dense<0xFF800000> : vector<8xf32>
    %291 = vector.multi_reduction <maximumf>, %290, %cst_93 [1] : vector<8x8xf32> to vector<8xf32>
    %292 = vector.shape_cast %291 : vector<8xf32> to vector<8x1xf32>
    %293 = vector.broadcast %292 : vector<8x1xf32> to vector<8x8xf32>
    %294 = arith.subf %290, %293 : vector<8x8xf32>
    %295 = math.exp %294 : vector<8x8xf32>
    %cst_94 = arith.constant dense<0.000000e+00> : vector<8xf32>
    %296 = vector.multi_reduction <add>, %295, %cst_94 [1] : vector<8x8xf32> to vector<8xf32>
    %297 = vector.shape_cast %296 : vector<8xf32> to vector<8x1xf32>
    %298 = tpu.reciprocal %297 {approx = true} : vector<8x1xf32> -> vector<8x1xf32>
    %299 = vector.broadcast %298 : vector<8x1xf32> to vector<8x8xf32>
    %300 = arith.mulf %295, %299 : vector<8x8xf32>
    %301 = vector.extract_strided_slice %286 {offsets = [0, 0], sizes = [8, 8], strides = [1, 1]} : vector<8x32xf32> to vector<8x8xf32>
    %cst_95 = arith.constant dense<0.000000e+00> : vector<8x8xf32>
    %302 = tpu.matmul %300, %301, %cst_95 {dimension_numbers = #tpu.dot_dimension_numbers<[1], [0], [0], [1], [0, 0, 1, 1], [], []>} : vector<8x8xf32>, vector<8x8xf32>, vector<8x8xf32> -> vector<8x8xf32>
    %303 = vector.extract_strided_slice %284 {offsets = [0, 8], sizes = [8, 8], strides = [1, 1]} : vector<8x32xf32> to vector<8x8xf32>
    %304 = vector.extract_strided_slice %285 {offsets = [0, 8], sizes = [8, 8], strides = [1, 1]} : vector<8x32xf32> to vector<8x8xf32>
    %cst_96 = arith.constant dense<0.000000e+00> : vector<8x8xf32>
    %305 = tpu.matmul %303, %304, %cst_96 {dimension_numbers = #tpu.dot_dimension_numbers<[1], [1], [0], [0], [0, 0, 1, 0], [], []>} : vector<8x8xf32>, vector<8x8xf32>, vector<8x8xf32> -> vector<8x8xf32>
    %306 = arith.addf %305, %3 : vector<8x8xf32>
    %cst_97 = arith.constant dense<0xFF800000> : vector<8xf32>
    %307 = vector.multi_reduction <maximumf>, %306, %cst_97 [1] : vector<8x8xf32> to vector<8xf32>
    %308 = vector.shape_cast %307 : vector<8xf32> to vector<8x1xf32>
    %309 = vector.broadcast %308 : vector<8x1xf32> to vector<8x8xf32>
    %310 = arith.subf %306, %309 : vector<8x8xf32>
    %311 = math.exp %310 : vector<8x8xf32>
    %cst_98 = arith.constant dense<0.000000e+00> : vector<8xf32>
    %312 = vector.multi_reduction <add>, %311, %cst_98 [1] : vector<8x8xf32> to vector<8xf32>
    %313 = vector.shape_cast %312 : vector<8xf32> to vector<8x1xf32>
    %314 = tpu.reciprocal %313 {approx = true} : vector<8x1xf32> -> vector<8x1xf32>
    %315 = vector.broadcast %314 : vector<8x1xf32> to vector<8x8xf32>
    %316 = arith.mulf %311, %315 : vector<8x8xf32>
    %317 = vector.extract_strided_slice %286 {offsets = [0, 8], sizes = [8, 8], strides = [1, 1]} : vector<8x32xf32> to vector<8x8xf32>
    %cst_99 = arith.constant dense<0.000000e+00> : vector<8x8xf32>
    %318 = tpu.matmul %316, %317, %cst_99 {dimension_numbers = #tpu.dot_dimension_numbers<[1], [0], [0], [1], [0, 0, 1, 1], [], []>} : vector<8x8xf32>, vector<8x8xf32>, vector<8x8xf32> -> vector<8x8xf32>
    %319 = vector.extract_strided_slice %284 {offsets = [0, 16], sizes = [8, 8], strides = [1, 1]} : vector<8x32xf32> to vector<8x8xf32>
    %320 = vector.extract_strided_slice %285 {offsets = [0, 16], sizes = [8, 8], strides = [1, 1]} : vector<8x32xf32> to vector<8x8xf32>
    %cst_100 = arith.constant dense<0.000000e+00> : vector<8x8xf32>
    %321 = tpu.matmul %319, %320, %cst_100 {dimension_numbers = #tpu.dot_dimension_numbers<[1], [1], [0], [0], [0, 0, 1, 0], [], []>} : vector<8x8xf32>, vector<8x8xf32>, vector<8x8xf32> -> vector<8x8xf32>
    %322 = arith.addf %321, %3 : vector<8x8xf32>
    %cst_101 = arith.constant dense<0xFF800000> : vector<8xf32>
    %323 = vector.multi_reduction <maximumf>, %322, %cst_101 [1] : vector<8x8xf32> to vector<8xf32>
    %324 = vector.shape_cast %323 : vector<8xf32> to vector<8x1xf32>
    %325 = vector.broadcast %324 : vector<8x1xf32> to vector<8x8xf32>
    %326 = arith.subf %322, %325 : vector<8x8xf32>
    %327 = math.exp %326 : vector<8x8xf32>
    %cst_102 = arith.constant dense<0.000000e+00> : vector<8xf32>
    %328 = vector.multi_reduction <add>, %327, %cst_102 [1] : vector<8x8xf32> to vector<8xf32>
    %329 = vector.shape_cast %328 : vector<8xf32> to vector<8x1xf32>
    %330 = tpu.reciprocal %329 {approx = true} : vector<8x1xf32> -> vector<8x1xf32>
    %331 = vector.broadcast %330 : vector<8x1xf32> to vector<8x8xf32>
    %332 = arith.mulf %327, %331 : vector<8x8xf32>
    %333 = vector.extract_strided_slice %286 {offsets = [0, 16], sizes = [8, 8], strides = [1, 1]} : vector<8x32xf32> to vector<8x8xf32>
    %cst_103 = arith.constant dense<0.000000e+00> : vector<8x8xf32>
    %334 = tpu.matmul %332, %333, %cst_103 {dimension_numbers = #tpu.dot_dimension_numbers<[1], [0], [0], [1], [0, 0, 1, 1], [], []>} : vector<8x8xf32>, vector<8x8xf32>, vector<8x8xf32> -> vector<8x8xf32>
    %335 = vector.extract_strided_slice %284 {offsets = [0, 24], sizes = [8, 8], strides = [1, 1]} : vector<8x32xf32> to vector<8x8xf32>
    %336 = vector.extract_strided_slice %285 {offsets = [0, 24], sizes = [8, 8], strides = [1, 1]} : vector<8x32xf32> to vector<8x8xf32>
    %cst_104 = arith.constant dense<0.000000e+00> : vector<8x8xf32>
    %337 = tpu.matmul %335, %336, %cst_104 {dimension_numbers = #tpu.dot_dimension_numbers<[1], [1], [0], [0], [0, 0, 1, 0], [], []>} : vector<8x8xf32>, vector<8x8xf32>, vector<8x8xf32> -> vector<8x8xf32>
    %338 = arith.addf %337, %3 : vector<8x8xf32>
    %cst_105 = arith.constant dense<0xFF800000> : vector<8xf32>
    %339 = vector.multi_reduction <maximumf>, %338, %cst_105 [1] : vector<8x8xf32> to vector<8xf32>
    %340 = vector.shape_cast %339 : vector<8xf32> to vector<8x1xf32>
    %341 = vector.broadcast %340 : vector<8x1xf32> to vector<8x8xf32>
    %342 = arith.subf %338, %341 : vector<8x8xf32>
    %343 = math.exp %342 : vector<8x8xf32>
    %cst_106 = arith.constant dense<0.000000e+00> : vector<8xf32>
    %344 = vector.multi_reduction <add>, %343, %cst_106 [1] : vector<8x8xf32> to vector<8xf32>
    %345 = vector.shape_cast %344 : vector<8xf32> to vector<8x1xf32>
    %346 = tpu.reciprocal %345 {approx = true} : vector<8x1xf32> -> vector<8x1xf32>
    %347 = vector.broadcast %346 : vector<8x1xf32> to vector<8x8xf32>
    %348 = arith.mulf %343, %347 : vector<8x8xf32>
    %349 = vector.extract_strided_slice %286 {offsets = [0, 24], sizes = [8, 8], strides = [1, 1]} : vector<8x32xf32> to vector<8x8xf32>
    %cst_107 = arith.constant dense<0.000000e+00> : vector<8x8xf32>
    %350 = tpu.matmul %348, %349, %cst_107 {dimension_numbers = #tpu.dot_dimension_numbers<[1], [0], [0], [1], [0, 0, 1, 1], [], []>} : vector<8x8xf32>, vector<8x8xf32>, vector<8x8xf32> -> vector<8x8xf32>
    %351 = tpu.concatenate %302, %318, %334, %350 in 1 : vector<8x8xf32>, vector<8x8xf32>, vector<8x8xf32>, vector<8x8xf32> -> vector<8x32xf32>
    %352 = tpu.concatenate %283, %351 in 0 : vector<8x32xf32>, vector<8x32xf32> -> vector<16x32xf32>
    %cst_108 = arith.constant dense<0.000000e+00> : vector<16x32xf32>
    %353 = tpu.matmul %352, %204, %cst_108 {dimension_numbers = #tpu.dot_dimension_numbers<[1], [0], [0], [1], [0, 0, 1, 1], [], []>} : vector<16x32xf32>, vector<32x32xf32>, vector<16x32xf32> -> vector<16x32xf32>
    %354 = vector.broadcast %205 : vector<1x32xf32> to vector<16x32xf32>
    %355 = arith.addf %353, %354 : vector<16x32xf32>
    %356 = arith.addf %177, %355 : vector<16x32xf32>
    %c0_109 = arith.constant 0 : index
    %c0_110 = arith.constant 0 : index
    %357 = vector.load %arg16[%c0_109, %c0_110] : memref<1x32xf32, #tpu.memory_space<vmem>>, vector<1x32xf32>
    %c0_111 = arith.constant 0 : index
    %c0_112 = arith.constant 0 : index
    %358 = vector.load %arg17[%c0_111, %c0_112] : memref<1x32xf32, #tpu.memory_space<vmem>>, vector<1x32xf32>
    %cst_113 = arith.constant dense<0.000000e+00> : vector<16xf32>
    %359 = vector.multi_reduction <add>, %356, %cst_113 [1] : vector<16x32xf32> to vector<16xf32>
    %360 = vector.shape_cast %359 : vector<16xf32> to vector<16x1xf32>
    %cst_114 = arith.constant 3.200000e+01 : f32
    %361 = vector.broadcast %cst_114 : f32 to vector<16x1xf32>
    %362 = arith.divf %360, %361 : vector<16x1xf32>
    %363 = vector.broadcast %362 : vector<16x1xf32> to vector<16x32xf32>
    %364 = arith.subf %356, %363 : vector<16x32xf32>
    %365 = arith.mulf %364, %364 : vector<16x32xf32>
    %cst_115 = arith.constant dense<0.000000e+00> : vector<16xf32>
    %366 = vector.multi_reduction <add>, %365, %cst_115 [1] : vector<16x32xf32> to vector<16xf32>
    %367 = vector.shape_cast %366 : vector<16xf32> to vector<16x1xf32>
    %cst_116 = arith.constant 3.200000e+01 : f32
    %368 = vector.broadcast %cst_116 : f32 to vector<16x1xf32>
    %369 = arith.divf %367, %368 : vector<16x1xf32>
    %370 = vector.broadcast %362 : vector<16x1xf32> to vector<16x32xf32>
    %371 = arith.subf %356, %370 : vector<16x32xf32>
    %cst_117 = arith.constant 9.99999997E-7 : f32
    %372 = vector.broadcast %cst_117 : f32 to vector<16x1xf32>
    %373 = arith.addf %369, %372 : vector<16x1xf32>
    %374 = math.rsqrt %373 : vector<16x1xf32>
    %375 = vector.broadcast %374 : vector<16x1xf32> to vector<16x32xf32>
    %376 = arith.mulf %371, %375 : vector<16x32xf32>
    %377 = vector.broadcast %357 : vector<1x32xf32> to vector<16x32xf32>
    %378 = arith.mulf %376, %377 : vector<16x32xf32>
    %379 = vector.broadcast %358 : vector<1x32xf32> to vector<16x32xf32>
    %380 = arith.addf %378, %379 : vector<16x32xf32>
    %c0_118 = arith.constant 0 : index
    %c0_119 = arith.constant 0 : index
    %381 = vector.load %arg18[%c0_118, %c0_119] : memref<32x64xf32, #tpu.memory_space<vmem>>, vector<32x64xf32>
    %cst_120 = arith.constant dense<0.000000e+00> : vector<16x64xf32>
    %382 = tpu.matmul %380, %381, %cst_120 {dimension_numbers = #tpu.dot_dimension_numbers<[1], [0], [0], [1], [0, 0, 1, 1], [], []>} : vector<16x32xf32>, vector<32x64xf32>, vector<16x64xf32> -> vector<16x64xf32>
    %c0_121 = arith.constant 0 : index
    %c0_122 = arith.constant 0 : index
    %383 = vector.load %arg19[%c0_121, %c0_122] : memref<1x64xf32, #tpu.memory_space<vmem>>, vector<1x64xf32>
    %384 = vector.broadcast %383 : vector<1x64xf32> to vector<16x64xf32>
    %385 = arith.addf %382, %384 : vector<16x64xf32>
    %cst_123 = arith.constant 0.000000e+00 : f32
    %386 = vector.broadcast %cst_123 : f32 to vector<16x64xf32>
    %387 = arith.maximumf %385, %386 : vector<16x64xf32>
    %c0_124 = arith.constant 0 : index
    %c0_125 = arith.constant 0 : index
    %388 = vector.load %arg20[%c0_124, %c0_125] : memref<64x32xf32, #tpu.memory_space<vmem>>, vector<64x32xf32>
    %cst_126 = arith.constant dense<0.000000e+00> : vector<16x32xf32>
    %389 = tpu.matmul %387, %388, %cst_126 {dimension_numbers = #tpu.dot_dimension_numbers<[1], [0], [0], [1], [0, 0, 1, 1], [], []>} : vector<16x64xf32>, vector<64x32xf32>, vector<16x32xf32> -> vector<16x32xf32>
    %c0_127 = arith.constant 0 : index
    %c0_128 = arith.constant 0 : index
    %390 = vector.load %arg21[%c0_127, %c0_128] : memref<1x32xf32, #tpu.memory_space<vmem>>, vector<1x32xf32>
    %391 = vector.broadcast %390 : vector<1x32xf32> to vector<16x32xf32>
    %392 = arith.addf %389, %391 : vector<16x32xf32>
    %393 = arith.addf %392, %356 : vector<16x32xf32>
    %c0_129 = arith.constant 0 : index
    %c0_130 = arith.constant 0 : index
    %394 = vector.load %arg22[%c0_129, %c0_130] : memref<1x32xf32, #tpu.memory_space<vmem>>, vector<1x32xf32>
    %c0_131 = arith.constant 0 : index
    %c0_132 = arith.constant 0 : index
    %395 = vector.load %arg23[%c0_131, %c0_132] : memref<1x32xf32, #tpu.memory_space<vmem>>, vector<1x32xf32>
    %cst_133 = arith.constant dense<0.000000e+00> : vector<16xf32>
    %396 = vector.multi_reduction <add>, %393, %cst_133 [1] : vector<16x32xf32> to vector<16xf32>
    %397 = vector.shape_cast %396 : vector<16xf32> to vector<16x1xf32>
    %cst_134 = arith.constant 3.200000e+01 : f32
    %398 = vector.broadcast %cst_134 : f32 to vector<16x1xf32>
    %399 = arith.divf %397, %398 : vector<16x1xf32>
    %400 = vector.broadcast %399 : vector<16x1xf32> to vector<16x32xf32>
    %401 = arith.subf %393, %400 : vector<16x32xf32>
    %402 = arith.mulf %401, %401 : vector<16x32xf32>
    %cst_135 = arith.constant dense<0.000000e+00> : vector<16xf32>
    %403 = vector.multi_reduction <add>, %402, %cst_135 [1] : vector<16x32xf32> to vector<16xf32>
    %404 = vector.shape_cast %403 : vector<16xf32> to vector<16x1xf32>
    %cst_136 = arith.constant 3.200000e+01 : f32
    %405 = vector.broadcast %cst_136 : f32 to vector<16x1xf32>
    %406 = arith.divf %404, %405 : vector<16x1xf32>
    %407 = vector.broadcast %399 : vector<16x1xf32> to vector<16x32xf32>
    %408 = arith.subf %393, %407 : vector<16x32xf32>
    %cst_137 = arith.constant 9.99999997E-7 : f32
    %409 = vector.broadcast %cst_137 : f32 to vector<16x1xf32>
    %410 = arith.addf %406, %409 : vector<16x1xf32>
    %411 = math.rsqrt %410 : vector<16x1xf32>
    %412 = vector.broadcast %411 : vector<16x1xf32> to vector<16x32xf32>
    %413 = arith.mulf %408, %412 : vector<16x32xf32>
    %414 = vector.broadcast %394 : vector<1x32xf32> to vector<16x32xf32>
    %415 = arith.mulf %413, %414 : vector<16x32xf32>
    %416 = vector.broadcast %395 : vector<1x32xf32> to vector<16x32xf32>
    %417 = arith.addf %415, %416 : vector<16x32xf32>
    %c0_138 = arith.constant 0 : index
    %c0_139 = arith.constant 0 : index
    %418 = vector.load %arg24[%c0_138, %c0_139] : memref<32x128xf32, #tpu.memory_space<vmem>>, vector<32x128xf32>
    %cst_140 = arith.constant dense<0.000000e+00> : vector<16x128xf32>
    %419 = tpu.matmul %417, %418, %cst_140 {dimension_numbers = #tpu.dot_dimension_numbers<[1], [0], [0], [1], [0, 0, 1, 1], [], []>} : vector<16x32xf32>, vector<32x128xf32>, vector<16x128xf32> -> vector<16x128xf32>
    %c0_141 = arith.constant 0 : index
    %c0_142 = arith.constant 0 : index
    %420 = vector.load %arg25[%c0_141, %c0_142] : memref<16x128xf32, #tpu.memory_space<vmem>>, vector<16x128xf32>
    tpu.vector_store %arg25[%c0_141, %c0_142], %419 {strides = array<i32>} : memref<16x128xf32, #tpu.memory_space<vmem>>, vector<16x128xf32>,
    return
  }
}

</mosaic_0001>

<llo_original>
// kernel: tpu_custom_call.1
$region0: #{tpu_custom_call.1}
  #allocation0 [shape = 'u32[]', space=smem, size = 0x4, offset = 0x4, fixed_abs, tag = 'smem constant byte address 0x4 - core index']
  #allocation1 [shape = 'u32[72,128]{1,0:T(1,128)}', space=vmem, size = 0x9000, scoped, tag = 'internal scratch']
  %s0 = inlined_call_operand.hbm [shape: f32[16,32], index: 0, kind: input, shape index: {}]
  %s1 = inlined_call_operand.hbm [shape: f32[16,32], index: 1, kind: input, shape index: {}]
  %s2 = inlined_call_operand.hbm [shape: f32[8,8], index: 2, kind: input, shape index: {}]
  %s3 = inlined_call_operand.hbm [shape: f32[8,8], index: 3, kind: input, shape index: {}]
  %s4 = inlined_call_operand.vmem [shape: f32[1,32], index: 4, kind: input, shape index: {}]
  %s5 = inlined_call_operand.vmem [shape: f32[1,32], index: 5, kind: input, shape index: {}]
  %s6 = inlined_call_operand.vmem [shape: f32[32,96], index: 6, kind: input, shape index: {}]
  %s7 = inlined_call_operand.vmem [shape: f32[1,96], index: 7, kind: input, shape index: {}]
  %s8 = inlined_call_operand.vmem [shape: f32[32,32], index: 8, kind: input, shape index: {}]
  %s9 = inlined_call_operand.vmem [shape: f32[1,32], index: 9, kind: input, shape index: {}]
  %s10 = inlined_call_operand.vmem [shape: f32[1,32], index: 10, kind: input, shape index: {}]
  %s11 = inlined_call_operand.vmem [shape: f32[1,32], index: 11, kind: input, shape index: {}]
  %s12 = inlined_call_operand.vmem [shape: f32[32,96], index: 12, kind: input, shape index: {}]
  %s13 = inlined_call_operand.vmem [shape: f32[1,96], index: 13, kind: input, shape index: {}]
  %s14 = inlined_call_operand.hbm [shape: f32[32,32], index: 14, kind: input, shape index: {}]
  %s15 = inlined_call_operand.vmem [shape: f32[1,32], index: 15, kind: input, shape index: {}]
  %s16 = inlined_call_operand.vmem [shape: f32[1,32], index: 16, kind: input, shape index: {}]
  %s17 = inlined_call_operand.vmem [shape: f32[1,32], index: 17, kind: input, shape index: {}]
  %s18 = inlined_call_operand.hbm [shape: f32[32,64], index: 18, kind: input, shape index: {}]
  %s19 = inlined_call_operand.vmem [shape: f32[1,64], index: 19, kind: input, shape index: {}]
  %s20 = inlined_call_operand.vmem [shape: f32[64,32], index: 20, kind: input, shape index: {}]
  %s21 = inlined_call_operand.vmem [shape: f32[1,32], index: 21, kind: input, shape index: {}]
  %s22 = inlined_call_operand.vmem [shape: f32[1,32], index: 22, kind: input, shape index: {}]
  %s23 = inlined_call_operand.vmem [shape: f32[1,32], index: 23, kind: input, shape index: {}]
  %s24 = inlined_call_operand.hbm [shape: f32[32,128], index: 24, kind: input, shape index: {}]
  %s25 = inlined_call_operand.hbm [shape: f32[16,128], index: 25, kind: output, shape index: {}]
  %s26 = sld [smem:[#allocation0]]
  $region138: #{tpu_custom_call.1} parent=0
    _
  %s28 = ssub.s32 1, %s26
  %s29 = scalar_select 0, %s28, %s26
  $region1: #{tpu_custom_call.1} parent=0
    #allocation2 [shape = 'u8[8192]{0}', space=vmem, size = 0x2000, scoped, tag = 'input window, operand 0, single buffered']
    #allocation3 [shape = 's32[1]{0}', space=sflag, size = 0x4, scoped, tag = 'scoped memory for tpu_custom_call.1']
    #allocation4 [shape = 's32[1]{0}', space=sflag, size = 0x4, scoped, tag = 'scoped memory for tpu_custom_call.1']
    #allocation5 [shape = 'u8[8192]{0}', space=vmem, size = 0x2000, scoped, tag = 'input window, operand 1, single buffered']
    #allocation6 [shape = 's32[1]{0}', space=sflag, size = 0x4, scoped, tag = 'scoped memory for tpu_custom_call.1']
    #allocation7 [shape = 'u8[4096]{0}', space=vmem, size = 0x1000, scoped, tag = 'input window, operand 2, single buffered']
    #allocation8 [shape = 'u8[4096]{0}', space=vmem, size = 0x1000, scoped, tag = 'input window, operand 3, single buffered']
    #allocation9 [shape = 's32[1]{0}', space=sflag, size = 0x4, scoped, tag = 'scoped memory for tpu_custom_call.1']
    #allocation10 [shape = 'u8[16384]{0}', space=vmem, size = 0x4000, scoped, tag = 'input window, operand 14, single buffered']
    #allocation11 [shape = 'u8[16384]{0}', space=vmem, size = 0x4000, scoped, tag = 'input window, operand 18, single buffered']
    #allocation12 [shape = 's32[1]{0}', space=sflag, size = 0x4, scoped, tag = 'scoped memory for tpu_custom_call.1']
    #allocation13 [shape = 'u8[16384]{0}', space=vmem, size = 0x4000, scoped, tag = 'input window, operand 24, single buffered']
    #allocation14 [shape = 'u8[8192]{0}', space=vmem, size = 0x2000, scoped, tag = 'output window, operand 0, single buffered']
    %30 = vsyncpa [#allocation3], 0
    %31 = vsyncpa [#allocation6], 0
    %32 = vsyncpa [#allocation9], 0
    %33 = vsyncpa [#allocation12], 0
    %34 = vsyncpa [#allocation4], 0
    // Predicated region
    $region2: #{tpu_custom_call.1} parent=1 // pred_check
      _
    $region3: #{tpu_custom_call.1} parent=1 // pred_check_branch
      %36 = sbr.rel (0) target = $region5
    $region4: #{tpu_custom_call.1} parent=1 // pred_region
      %38 = vsyncadd [#allocation3], 0
      %s39 = sshll.u32 %s0, 4
      %s40 = int_to_ptr.hbm [resolvable:$true] %s39
      %s41 = sshll.u32 [#allocation2], 4
      %s42 = int_to_ptr.vmem [resolvable:$true] %s41
      %47 = dma.hbm_to_vmem [thread:$0]  %s40, 256, %s42, [#allocation3], 128, 128, 8
    $region5: #{tpu_custom_call.1} parent=1 // pred_fallthru
      _
    // Predicated region
    $region6: #{tpu_custom_call.1} parent=1 // pred_check
      _
    $region7: #{tpu_custom_call.1} parent=1 // pred_check_branch
      %49 = sbr.rel (0) target = $region9
    $region8: #{tpu_custom_call.1} parent=1 // pred_region
      %51 = vsyncadd [#allocation6], 0
      %s52 = sshll.u32 %s1, 4
      %s53 = int_to_ptr.hbm [resolvable:$true] %s52
      %s54 = sshll.u32 [#allocation5], 4
      %s55 = int_to_ptr.vmem [resolvable:$true] %s54
      %60 = dma.hbm_to_vmem [thread:$0]  %s53, 256, %s55, [#allocation6], 128, 128, 8
    $region9: #{tpu_custom_call.1} parent=1 // pred_fallthru
      _
    // Predicated region
    $region10: #{tpu_custom_call.1} parent=1 // pred_check
      _
    $region11: #{tpu_custom_call.1} parent=1 // pred_check_branch
      %62 = sbr.rel (0) target = $region13
    $region12: #{tpu_custom_call.1} parent=1 // pred_region
      %64 = vsyncadd [#allocation6], 0
      %s66 = sshll.u32 %s2, 4
      %s67 = int_to_ptr.hbm [resolvable:$true] %s66
      %s68 = sshll.u32 [#allocation7], 4
      %s69 = int_to_ptr.vmem [resolvable:$true] %s68
      %71 = dma.hbm_to_vmem [thread:$0]  %s67, 128, %s69, [#allocation6]
    $region13: #{tpu_custom_call.1} parent=1 // pred_fallthru
      _
    // Predicated region
    $region14: #{tpu_custom_call.1} parent=1 // pred_check
      _
    $region15: #{tpu_custom_call.1} parent=1 // pred_check_branch
      %73 = sbr.rel (0) target = $region17
    $region16: #{tpu_custom_call.1} parent=1 // pred_region
      %75 = vsyncadd [#allocation9], 0
      %s77 = sshll.u32 %s3, 4
      %s78 = int_to_ptr.hbm [resolvable:$true] %s77
      %s79 = sshll.u32 [#allocation8], 4
      %s80 = int_to_ptr.vmem [resolvable:$true] %s79
      %82 = dma.hbm_to_vmem [thread:$0]  %s78, 128, %s80, [#allocation9]
    $region17: #{tpu_custom_call.1} parent=1 // pred_fallthru
      _
    // Predicated region
    $region18: #{tpu_custom_call.1} parent=1 // pred_check
      _
    $region19: #{tpu_custom_call.1} parent=1 // pred_check_branch
      %84 = sbr.rel (0) target = $region21
    $region20: #{tpu_custom_call.1} parent=1 // pred_region
      _
    $region21: #{tpu_custom_call.1} parent=1 // pred_fallthru
      _
    // Predicated region
    $region22: #{tpu_custom_call.1} parent=1 // pred_check
      _
    $region23: #{tpu_custom_call.1} parent=1 // pred_check_branch
      %86 = sbr.rel (0) target = $region25
    $region24: #{tpu_custom_call.1} parent=1 // pred_region
      _
    $region25: #{tpu_custom_call.1} parent=1 // pred_fallthru
      _
    // Predicated region
    $region26: #{tpu_custom_call.1} parent=1 // pred_check
      _
    $region27: #{tpu_custom_call.1} parent=1 // pred_check_branch
      %88 = sbr.rel (0) target = $region29
    $region28: #{tpu_custom_call.1} parent=1 // pred_region
      _
    $region29: #{tpu_custom_call.1} parent=1 // pred_fallthru
      _
    // Predicated region
    $region30: #{tpu_custom_call.1} parent=1 // pred_check
      _
    $region31: #{tpu_custom_call.1} parent=1 // pred_check_branch
      %90 = sbr.rel (0) target = $region33
    $region32: #{tpu_custom_call.1} parent=1 // pred_region
      _
    $region33: #{tpu_custom_call.1} parent=1 // pred_fallthru
      _
    // Predicated region
    $region34: #{tpu_custom_call.1} parent=1 // pred_check
      _
    $region35: #{tpu_custom_call.1} parent=1 // pred_check_branch
      %92 = sbr.rel (0) target = $region37
    $region36: #{tpu_custom_call.1} parent=1 // pred_region
      _
    $region37: #{tpu_custom_call.1} parent=1 // pred_fallthru
      _
    // Predicated region
    $region38: #{tpu_custom_call.1} parent=1 // pred_check
      _
    $region39: #{tpu_custom_call.1} parent=1 // pred_check_branch
      %94 = sbr.rel (0) target = $region41
    $region40: #{tpu_custom_call.1} parent=1 // pred_region
      _
    $region41: #{tpu_custom_call.1} parent=1 // pred_fallthru
      _
    // Predicated region
    $region42: #{tpu_custom_call.1} parent=1 // pred_check
      _
    $region43: #{tpu_custom_call.1} parent=1 // pred_check_branch
      %96 = sbr.rel (0) target = $region45
    $region44: #{tpu_custom_call.1} parent=1 // pred_region
      _
    $region45: #{tpu_custom_call.1} parent=1 // pred_fallthru
      _
    // Predicated region
    $region46: #{tpu_custom_call.1} parent=1 // pred_check
      _
    $region47: #{tpu_custom_call.1} parent=1 // pred_check_branch
      %98 = sbr.rel (0) target = $region49
    $region48: #{tpu_custom_call.1} parent=1 // pred_region
      _
    $region49: #{tpu_custom_call.1} parent=1 // pred_fallthru
      _
    // Predicated region
    $region50: #{tpu_custom_call.1} parent=1 // pred_check
      _
    $region51: #{tpu_custom_call.1} parent=1 // pred_check_branch
      %100 = sbr.rel (0) target = $region53
    $region52: #{tpu_custom_call.1} parent=1 // pred_region
      _
    $region53: #{tpu_custom_call.1} parent=1 // pred_fallthru
      _
    // Predicated region
    $region54: #{tpu_custom_call.1} parent=1 // pred_check
      _
    $region55: #{tpu_custom_call.1} parent=1 // pred_check_branch
      %102 = sbr.rel (0) target = $region57
    $region56: #{tpu_custom_call.1} parent=1 // pred_region
      _
    $region57: #{tpu_custom_call.1} parent=1 // pred_fallthru
      _
    // Predicated region
    $region58: #{tpu_custom_call.1} parent=1 // pred_check
      _
    $region59: #{tpu_custom_call.1} parent=1 // pred_check_branch
      %104 = sbr.rel (0) target = $region61
    $region60: #{tpu_custom_call.1} parent=1 // pred_region
      %106 = vsyncadd [#allocation9], 0
      %s107 = sshll.u32 %s14, 4
      %s108 = int_to_ptr.hbm [resolvable:$true] %s107
      %s109 = sshll.u32 [#allocation10], 4
      %s110 = int_to_ptr.vmem [resolvable:$true] %s109
      %115 = dma.hbm_to_vmem [thread:$0]  %s108, 512, %s110, [#allocation9], 128, 128, 8
    $region61: #{tpu_custom_call.1} parent=1 // pred_fallthru
      _
    // Predicated region
    $region62: #{tpu_custom_call.1} parent=1 // pred_check
      _
    $region63: #{tpu_custom_call.1} parent=1 // pred_check_branch
      %117 = sbr.rel (0) target = $region65
    $region64: #{tpu_custom_call.1} parent=1 // pred_region
      _
    $region65: #{tpu_custom_call.1} parent=1 // pred_fallthru
      _
    // Predicated region
    $region66: #{tpu_custom_call.1} parent=1 // pred_check
      _
    $region67: #{tpu_custom_call.1} parent=1 // pred_check_branch
      %119 = sbr.rel (0) target = $region69
    $region68: #{tpu_custom_call.1} parent=1 // pred_region
      _
    $region69: #{tpu_custom_call.1} parent=1 // pred_fallthru
      _
    // Predicated region
    $region70: #{tpu_custom_call.1} parent=1 // pred_check
      _
    $region71: #{tpu_custom_call.1} parent=1 // pred_check_branch
      %121 = sbr.rel (0) target = $region73
    $region72: #{tpu_custom_call.1} parent=1 // pred_region
      _
    $region73: #{tpu_custom_call.1} parent=1 // pred_fallthru
      _
    // Predicated region
    $region74: #{tpu_custom_call.1} parent=1 // pred_check
      _
    $region75: #{tpu_custom_call.1} parent=1 // pred_check_branch
      %123 = sbr.rel (0) target = $region77
    $region76: #{tpu_custom_call.1} parent=1 // pred_region
      %125 = vsyncadd [#allocation12], 0
      %s126 = sshll.u32 %s18, 4
      %s127 = int_to_ptr.hbm [resolvable:$true] %s126
      %s128 = sshll.u32 [#allocation11], 4
      %s129 = int_to_ptr.vmem [resolvable:$true] %s128
      %134 = dma.hbm_to_vmem [thread:$0]  %s127, 512, %s129, [#allocation12], 128, 128, 8
    $region77: #{tpu_custom_call.1} parent=1 // pred_fallthru
      _
    // Predicated region
    $region78: #{tpu_custom_call.1} parent=1 // pred_check
      _
    $region79: #{tpu_custom_call.1} parent=1 // pred_check_branch
      %136 = sbr.rel (0) target = $region81
    $region80: #{tpu_custom_call.1} parent=1 // pred_region
      _
    $region81: #{tpu_custom_call.1} parent=1 // pred_fallthru
      _
    // Predicated region
    $region82: #{tpu_custom_call.1} parent=1 // pred_check
      _
    $region83: #{tpu_custom_call.1} parent=1 // pred_check_branch
      %138 = sbr.rel (0) target = $region85
    $region84: #{tpu_custom_call.1} parent=1 // pred_region
      _
    $region85: #{tpu_custom_call.1} parent=1 // pred_fallthru
      _
    // Predicated region
    $region86: #{tpu_custom_call.1} parent=1 // pred_check
      _
    $region87: #{tpu_custom_call.1} parent=1 // pred_check_branch
      %140 = sbr.rel (0) target = $region89
    $region88: #{tpu_custom_call.1} parent=1 // pred_region
      _
    $region89: #{tpu_custom_call.1} parent=1 // pred_fallthru
      _
    // Predicated region
    $region90: #{tpu_custom_call.1} parent=1 // pred_check
      _
    $region91: #{tpu_custom_call.1} parent=1 // pred_check_branch
      %142 = sbr.rel (0) target = $region93
    $region92: #{tpu_custom_call.1} parent=1 // pred_region
      _
    $region93: #{tpu_custom_call.1} parent=1 // pred_fallthru
      _
    // Predicated region
    $region94: #{tpu_custom_call.1} parent=1 // pred_check
      _
    $region95: #{tpu_custom_call.1} parent=1 // pred_check_branch
      %144 = sbr.rel (0) target = $region97
    $region96: #{tpu_custom_call.1} parent=1 // pred_region
      _
    $region97: #{tpu_custom_call.1} parent=1 // pred_fallthru
      _
    // Predicated region
    $region98: #{tpu_custom_call.1} parent=1 // pred_check
      _
    $region99: #{tpu_custom_call.1} parent=1 // pred_check_branch
      %146 = sbr.rel (0) target = $region101
    $region100: #{tpu_custom_call.1} parent=1 // pred_region
      %148 = vsyncadd [#allocation12], 0
      %s149 = sshll.u32 %s24, 4
      %s150 = int_to_ptr.hbm [resolvable:$true] %s149
      %s151 = sshll.u32 [#allocation13], 4
      %s152 = int_to_ptr.vmem [resolvable:$true] %s151
      %157 = dma.hbm_to_vmem [thread:$0]  %s150, 512, %s152, [#allocation12], 128, 128, 8
    $region101: #{tpu_custom_call.1} parent=1 // pred_fallthru
      _
    // Predicated region
    $region102: #{tpu_custom_call.1} parent=1 // pred_check
      _
    $region103: #{tpu_custom_call.1} parent=1 // pred_check_branch
      %159 = sbr.rel (0) target = $region105
    $region104: #{tpu_custom_call.1} parent=1 // pred_region
      %161 = dma.done [#allocation3], 256
    $region105: #{tpu_custom_call.1} parent=1 // pred_fallthru
      _
    // Predicated region
    $region106: #{tpu_custom_call.1} parent=1 // pred_check
      _
    $region107: #{tpu_custom_call.1} parent=1 // pred_check_branch
      %163 = sbr.rel (0) target = $region109
    $region108: #{tpu_custom_call.1} parent=1 // pred_region
      %165 = dma.done [#allocation6], 256
    $region109: #{tpu_custom_call.1} parent=1 // pred_fallthru
      _
    // Predicated region
    $region110: #{tpu_custom_call.1} parent=1 // pred_check
      _
    $region111: #{tpu_custom_call.1} parent=1 // pred_check_branch
      %167 = sbr.rel (0) target = $region113
    $region112: #{tpu_custom_call.1} parent=1 // pred_region
      %169 = dma.done [#allocation6], 128
    $region113: #{tpu_custom_call.1} parent=1 // pred_fallthru
      _
    // Predicated region
    $region114: #{tpu_custom_call.1} parent=1 // pred_check
      _
    $region115: #{tpu_custom_call.1} parent=1 // pred_check_branch
      %171 = sbr.rel (0) target = $region117
    $region116: #{tpu_custom_call.1} parent=1 // pred_region
      %173 = dma.done [#allocation9], 128
    $region117: #{tpu_custom_call.1} parent=1 // pred_fallthru
      _
    // Predicated region
    $region118: #{tpu_custom_call.1} parent=1 // pred_check
      _
    $region119: #{tpu_custom_call.1} parent=1 // pred_check_branch
      %175 = sbr.rel (0) target = $region121
    $region120: #{tpu_custom_call.1} parent=1 // pred_region
      %177 = dma.done [#allocation9], 512
    $region121: #{tpu_custom_call.1} parent=1 // pred_fallthru
      _
    // Predicated region
    $region122: #{tpu_custom_call.1} parent=1 // pred_check
      _
    $region123: #{tpu_custom_call.1} parent=1 // pred_check_branch
      %179 = sbr.rel (0) target = $region125
    $region124: #{tpu_custom_call.1} parent=1 // pred_region
      %181 = dma.done [#allocation12], 512
    $region125: #{tpu_custom_call.1} parent=1 // pred_fallthru
      _
    // Predicated region
    $region126: #{tpu_custom_call.1} parent=1 // pred_check
      _
    $region127: #{tpu_custom_call.1} parent=1 // pred_check_branch
      %183 = sbr.rel (0) target = $region129
    $region128: #{tpu_custom_call.1} parent=1 // pred_region
      %185 = dma.done [#allocation12], 512
    $region129: #{tpu_custom_call.1} parent=1 // pred_fallthru
      _
    %v186 = vld [vmem:[#allocation2] sm:$0xff]
    %v187 = vld [vmem:[#allocation2 + $0x8] sm:$0xff]
    %v188 = vld [vmem:[#allocation5] sm:$0xff]
    %v189 = vld [vmem:[#allocation5 + $0x8] sm:$0xff]
    %v190 = vld [vmem:[#allocation7] sm:$0xff]
    %v191 = vld [vmem:[#allocation8] sm:$0xff]
    %v192 = vld [vmem:[%s4] sm:$0x1]
    %v193 = vld [vmem:[%s5] sm:$0x1]
    %vm194 = vcmask 261120
    %v195 = vsel %vm194, %v186, 0.0
    %196 = vadd.xlane.f32.xlu0 %v195
    %v197 = vpop.xlane.xlu0 %196
    %v198 = vsel %vm194, %v187, 0.0
    %199 = vadd.xlane.f32.xlu0 %v198
    %v200 = vpop.xlane.xlu0 %199
    %v201 = vrcp.pop 32.0
    %v202 = vmul.f32 32.0, %v201
    %v203 = vsub.f32 1.0, %v202
    %v204 = vmul.f32 %v201, %v203
    %v205 = vadd.f32 %v201, %v204
    %vm206 = vweird.f32 %v201
    %v207 = vsel %vm206, %v201, %v205
    %v208 = vmul.f32 %v197, %v207
    %v209 = vmul.f32 %v200, %v207
    %v210 = vsub.f32 %v186, %v208
    %v211 = vsub.f32 %v187, %v209
    %v212 = vmul.f32 %v210, %v210
    %v213 = vmul.f32 %v211, %v211
    %v214 = vsel %vm194, %v212, 0.0
    %215 = vadd.xlane.f32.xlu0 %v214
    %v216 = vpop.xlane.xlu0 %215
    %v217 = vsel %vm194, %v213, 0.0
    %218 = vadd.xlane.f32.xlu0 %v217
    %v219 = vpop.xlane.xlu0 %218
    %v220 = vmul.f32 %v216, %v207
    %v221 = vmul.f32 %v219, %v207
    %v222 = vadd.f32 %v220, 1e-05
    %v223 = vadd.f32 %v221, 1e-05
    %v224 = vrsqrt.pop %v222
    %v225 = vmul.f32 %v224, %v222
    %v226 = vmul.f32 %v225, %v224
    %v227 = vmul.f32 0.5, %v226
    %v228 = vsub.f32 1.5, %v227
    %v229 = vmul.f32 %v224, %v228
    %vm230 = vweird.f32 %v222
    %vm231 = vweird.f32 %v224
    %vm232 = vmor %vm230, %vm231
    %v233 = vsel %vm232, %v224, %v229
    %v234 = vrsqrt.pop %v223
    %v235 = vmul.f32 %v234, %v223
    %v236 = vmul.f32 %v235, %v234
    %v237 = vmul.f32 0.5, %v236
    %v238 = vsub.f32 1.5, %v237
    %v239 = vmul.f32 %v234, %v238
    %vm240 = vweird.f32 %v223
    %vm241 = vweird.f32 %v234
    %vm242 = vmor %vm240, %vm241
    %v243 = vsel %vm242, %v234, %v239
    %v244 = vmul.f32 %v210, %v233
    %v245 = vmul.f32 %v211, %v243
    %v247 = vperm.slane %v192, 0
    %v249 = vmul.f32 %v244, %v247
    %v250 = vmul.f32 %v245, %v247
    %v252 = vperm.slane %v193, 0
    %v254 = vadd.f32 %v249, %v252
    %v255 = vadd.f32 %v250, %v252
    %v256 = vld [vmem:[%s6] sm:$0xff]
    %v257 = vld [vmem:[%s6 + $0x8] sm:$0xff]
    %v258 = vld [vmem:[%s6 + $0x10] sm:$0xff]
    %v259 = vld [vmem:[%s6 + $0x18] sm:$0xff]
    %v260 = vld [vmem:[%s7] sm:$0x1]
    %v261 = vld [vmem:[%s8] sm:$0xff]
    %v262 = vld [vmem:[%s8 + $0x8] sm:$0xff]
    %v263 = vld [vmem:[%s8 + $0x10] sm:$0xff]
    %v264 = vld [vmem:[%s8 + $0x18] sm:$0xff]
    %v265 = vld [vmem:[%s9] sm:$0x1]
    %v267 = vperm.slane %v260, 0
    %v270 = vsel %vm194, %v254, 0
    %v273 = vsel %vm194, %v255, 0
    %275 = vmatpush.msra.mxu0 0.0
    %276 = vmatpush.msra.mxu0 0.0
    %277 = vmatpush.msra.mxu0 0.0
    %278 = vmatpush.msra.mxu0 0.0
    %279 = vmatpush.msra.mxu0 0.0
    %280 = vmatpush.msra.mxu0 0.0
    %281 = vmatpush.msra.mxu0 0.0
    %282 = vmatpush.msra.mxu0 0.0
    %283 = vmatpush.msra.mxu0 0.0
    %284 = vmatpush.msra.mxu0 0.0
    %285 = vmatpush.msra.mxu0 0.0
    %286 = vmatpush.msra.mxu0 0.0
    %287 = vmatpush.msra.mxu0 %v259
    %288 = vmatpush.msra.mxu0 %v258
    %289 = vmatpush.msra.mxu0 %v257
    %290 = vmatpush.msra.mxu0 %v256
    %291 = vmatmul.f32.gmra.mxu0 %v270
    %v292 = vpop.f32.mrf.mxu0
    %v293 = vadd.f32 %v267, %v292
    %294 = vmatmul.f32.gmra.mxu0 %v273
    %v295 = vpop.f32.mrf.mxu0
    %v296 = vadd.f32 %v267, %v295
    %297 = vdwg.mxu0
    %299 = vrot.lane.b32.xlu0 %v293, 96
    %v300 = vpop.permute.xlu0 %299
    %vm301 = vcmask 64512
    %v302 = vsel %vm301, %v293, 0
    %v304 = vsel %vm301, %v300, 0
    %306 = vmatpush.xpose.msra.mxu0 0.0
    %307 = vmatpush.xpose.msra.mxu0 0.0
    %308 = vmatpush.xpose.msra.mxu0 0.0
    %309 = vmatpush.xpose.msra.mxu0 0.0
    %310 = vmatpush.xpose.msra.mxu0 0.0
    %311 = vmatpush.xpose.msra.mxu0 0.0
    %312 = vmatpush.xpose.msra.mxu0 0.0
    %313 = vmatpush.xpose.msra.mxu0 0.0
    %314 = vmatpush.xpose.msra.mxu0 0.0
    %315 = vmatpush.xpose.msra.mxu0 0.0
    %316 = vmatpush.xpose.msra.mxu0 0.0
    %317 = vmatpush.xpose.msra.mxu0 0.0
    %318 = vmatpush.xpose.msra.mxu0 0.0
    %319 = vmatpush.xpose.msra.mxu0 0.0
    %320 = vmatpush.xpose.msra.mxu0 0.0
    %321 = vmatpush.xpose.msra.mxu0 %v304
    %322 = vmatmul.f32.gmra.mxu0 %v302
    %v323 = vpop.f32.mrf.mxu0
    %v324 = vadd.f32 %v190, %v323
    %325 = vdwg.mxu0
    %v326 = vsel %vm301, %v324, -inf
    %327 = vmax.xlane.f32.xlu0 %v326
    %v328 = vpop.xlane.xlu0 %327
    %v329 = vsub.f32 %v324, %v328
    %v330 = vmul.f32 %v329, 1.442695
    %v331 = vpow.pop %v330
    %v332 = vsel %vm301, %v331, 0.0
    %333 = vadd.xlane.f32.xlu0 %v332
    %v334 = vpop.xlane.xlu0 %333
    %v335 = vrcp.pop %v334
    %v336 = vmul.f32 %v331, %v335
    %337 = vrot.lane.b32.xlu0 %v293, 64
    %v338 = vpop.permute.xlu0 %337
    %v341 = vsel %vm301, %v336, 0
    %343 = vmatpush.msra.mxu0 0.0
    %344 = vmatpush.msra.mxu0 0.0
    %345 = vmatpush.msra.mxu0 0.0
    %346 = vmatpush.msra.mxu0 0.0
    %347 = vmatpush.msra.mxu0 0.0
    %348 = vmatpush.msra.mxu0 0.0
    %349 = vmatpush.msra.mxu0 0.0
    %350 = vmatpush.msra.mxu0 0.0
    %351 = vmatpush.msra.mxu0 0.0
    %352 = vmatpush.msra.mxu0 0.0
    %353 = vmatpush.msra.mxu0 0.0
    %354 = vmatpush.msra.mxu0 0.0
    %355 = vmatpush.msra.mxu0 0.0
    %356 = vmatpush.msra.mxu0 0.0
    %357 = vmatpush.msra.mxu0 0.0
    %358 = vmatpush.msra.mxu0 %v338
    %359 = vmatmul.f32.gmra.mxu0 %v341
    %v360 = vpop.f32.mrf.mxu0
    %v361 = vadd.f32 0.0, %v360
    %362 = vdwg.mxu0
    %363 = vrot.lane.b32.xlu0 %v293, 120
    %v364 = vpop.permute.xlu0 %363
    %365 = vrot.lane.b32.xlu0 %v293, 88
    %v366 = vpop.permute.xlu0 %365
    %v367 = vsel %vm301, %v364, 0
    %v369 = vsel %vm301, %v366, 0
    %371 = vmatpush.xpose.msra.mxu0 0.0
    %372 = vmatpush.xpose.msra.mxu0 0.0
    %373 = vmatpush.xpose.msra.mxu0 0.0
    %374 = vmatpush.xpose.msra.mxu0 0.0
    %375 = vmatpush.xpose.msra.mxu0 0.0
    %376 = vmatpush.xpose.msra.mxu0 0.0
    %377 = vmatpush.xpose.msra.mxu0 0.0
    %378 = vmatpush.xpose.msra.mxu0 0.0
    %379 = vmatpush.xpose.msra.mxu0 0.0
    %380 = vmatpush.xpose.msra.mxu0 0.0
    %381 = vmatpush.xpose.msra.mxu0 0.0
    %382 = vmatpush.xpose.msra.mxu0 0.0
    %383 = vmatpush.xpose.msra.mxu0 0.0
    %384 = vmatpush.xpose.msra.mxu0 0.0
    %385 = vmatpush.xpose.msra.mxu0 0.0
    %386 = vmatpush.xpose.msra.mxu0 %v369
    %387 = vmatmul.f32.gmra.mxu0 %v367
    %v388 = vpop.f32.mrf.mxu0
    %v389 = vadd.f32 %v190, %v388
    %390 = vdwg.mxu0
    %v391 = vsel %vm301, %v389, -inf
    %392 = vmax.xlane.f32.xlu0 %v391
    %v393 = vpop.xlane.xlu0 %392
    %v394 = vsub.f32 %v389, %v393
    %v395 = vmul.f32 %v394, 1.442695
    %v396 = vpow.pop %v395
    %v397 = vsel %vm301, %v396, 0.0
    %398 = vadd.xlane.f32.xlu0 %v397
    %v399 = vpop.xlane.xlu0 %398
    %v400 = vrcp.pop %v399
    %v401 = vmul.f32 %v396, %v400
    %402 = vrot.lane.b32.xlu0 %v293, 56
    %v403 = vpop.permute.xlu0 %402
    %v406 = vsel %vm301, %v401, 0
    %408 = vmatpush.msra.mxu0 0.0
    %409 = vmatpush.msra.mxu0 0.0
    %410 = vmatpush.msra.mxu0 0.0
    %411 = vmatpush.msra.mxu0 0.0
    %412 = vmatpush.msra.mxu0 0.0
    %413 = vmatpush.msra.mxu0 0.0
    %414 = vmatpush.msra.mxu0 0.0
    %415 = vmatpush.msra.mxu0 0.0
    %416 = vmatpush.msra.mxu0 0.0
    %417 = vmatpush.msra.mxu0 0.0
    %418 = vmatpush.msra.mxu0 0.0
    %419 = vmatpush.msra.mxu0 0.0
    %420 = vmatpush.msra.mxu0 0.0
    %421 = vmatpush.msra.mxu0 0.0
    %422 = vmatpush.msra.mxu0 0.0
    %423 = vmatpush.msra.mxu0 %v403
    %424 = vmatmul.f32.gmra.mxu0 %v406
    %v425 = vpop.f32.mrf.mxu0
    %v426 = vadd.f32 0.0, %v425
    %427 = vdwg.mxu0
    %428 = vrot.lane.b32.xlu0 %v293, 112
    %v429 = vpop.permute.xlu0 %428
    %430 = vrot.lane.b32.xlu0 %v293, 80
    %v431 = vpop.permute.xlu0 %430
    %v432 = vsel %vm301, %v429, 0
    %v434 = vsel %vm301, %v431, 0
    %436 = vmatpush.xpose.msra.mxu0 0.0
    %437 = vmatpush.xpose.msra.mxu0 0.0
    %438 = vmatpush.xpose.msra.mxu0 0.0
    %439 = vmatpush.xpose.msra.mxu0 0.0
    %440 = vmatpush.xpose.msra.mxu0 0.0
    %441 = vmatpush.xpose.msra.mxu0 0.0
    %442 = vmatpush.xpose.msra.mxu0 0.0
    %443 = vmatpush.xpose.msra.mxu0 0.0
    %444 = vmatpush.xpose.msra.mxu0 0.0
    %445 = vmatpush.xpose.msra.mxu0 0.0
    %446 = vmatpush.xpose.msra.mxu0 0.0
    %447 = vmatpush.xpose.msra.mxu0 0.0
    %448 = vmatpush.xpose.msra.mxu0 0.0
    %449 = vmatpush.xpose.msra.mxu0 0.0
    %450 = vmatpush.xpose.msra.mxu0 0.0
    %451 = vmatpush.xpose.msra.mxu0 %v434
    %452 = vmatmul.f32.gmra.mxu0 %v432
    %v453 = vpop.f32.mrf.mxu0
    %v454 = vadd.f32 %v190, %v453
    %455 = vdwg.mxu0
    %v456 = vsel %vm301, %v454, -inf
    %457 = vmax.xlane.f32.xlu0 %v456
    %v458 = vpop.xlane.xlu0 %457
    %v459 = vsub.f32 %v454, %v458
    %v460 = vmul.f32 %v459, 1.442695
    %v461 = vpow.pop %v460
    %v462 = vsel %vm301, %v461, 0.0
    %463 = vadd.xlane.f32.xlu0 %v462
    %v464 = vpop.xlane.xlu0 %463
    %v465 = vrcp.pop %v464
    %v466 = vmul.f32 %v461, %v465
    %467 = vrot.lane.b32.xlu0 %v293, 48
    %v468 = vpop.permute.xlu0 %467
    %v471 = vsel %vm301, %v466, 0
    %473 = vmatpush.msra.mxu0 0.0
    %474 = vmatpush.msra.mxu0 0.0
    %475 = vmatpush.msra.mxu0 0.0
    %476 = vmatpush.msra.mxu0 0.0
    %477 = vmatpush.msra.mxu0 0.0
    %478 = vmatpush.msra.mxu0 0.0
    %479 = vmatpush.msra.mxu0 0.0
    %480 = vmatpush.msra.mxu0 0.0
    %481 = vmatpush.msra.mxu0 0.0
    %482 = vmatpush.msra.mxu0 0.0
    %483 = vmatpush.msra.mxu0 0.0
    %484 = vmatpush.msra.mxu0 0.0
    %485 = vmatpush.msra.mxu0 0.0
    %486 = vmatpush.msra.mxu0 0.0
    %487 = vmatpush.msra.mxu0 0.0
    %488 = vmatpush.msra.mxu0 %v468
    %489 = vmatmul.f32.gmra.mxu0 %v471
    %v490 = vpop.f32.mrf.mxu0
    %v491 = vadd.f32 0.0, %v490
    %492 = vdwg.mxu0
    %493 = vrot.lane.b32.xlu0 %v293, 104
    %v494 = vpop.permute.xlu0 %493
    %495 = vrot.lane.b32.xlu0 %v293, 72
    %v496 = vpop.permute.xlu0 %495
    %v497 = vsel %vm301, %v494, 0
    %v499 = vsel %vm301, %v496, 0
    %501 = vmatpush.xpose.msra.mxu0 0.0
    %502 = vmatpush.xpose.msra.mxu0 0.0
    %503 = vmatpush.xpose.msra.mxu0 0.0
    %504 = vmatpush.xpose.msra.mxu0 0.0
    %505 = vmatpush.xpose.msra.mxu0 0.0
    %506 = vmatpush.xpose.msra.mxu0 0.0
    %507 = vmatpush.xpose.msra.mxu0 0.0
    %508 = vmatpush.xpose.msra.mxu0 0.0
    %509 = vmatpush.xpose.msra.mxu0 0.0
    %510 = vmatpush.xpose.msra.mxu0 0.0
    %511 = vmatpush.xpose.msra.mxu0 0.0
    %512 = vmatpush.xpose.msra.mxu0 0.0
    %513 = vmatpush.xpose.msra.mxu0 0.0
    %514 = vmatpush.xpose.msra.mxu0 0.0
    %515 = vmatpush.xpose.msra.mxu0 0.0
    %516 = vmatpush.xpose.msra.mxu0 %v499
    %517 = vmatmul.f32.gmra.mxu0 %v497
    %v518 = vpop.f32.mrf.mxu0
    %v519 = vadd.f32 %v190, %v518
    %520 = vdwg.mxu0
    %v521 = vsel %vm301, %v519, -inf
    %522 = vmax.xlane.f32.xlu0 %v521
    %v523 = vpop.xlane.xlu0 %522
    %v524 = vsub.f32 %v519, %v523
    %v525 = vmul.f32 %v524, 1.442695
    %v526 = vpow.pop %v525
    %v527 = vsel %vm301, %v526, 0.0
    %528 = vadd.xlane.f32.xlu0 %v527
    %v529 = vpop.xlane.xlu0 %528
    %v530 = vrcp.pop %v529
    %v531 = vmul.f32 %v526, %v530
    %532 = vrot.lane.b32.xlu0 %v293, 40
    %v533 = vpop.permute.xlu0 %532
    %v536 = vsel %vm301, %v531, 0
    %538 = vmatpush.msra.mxu0 0.0
    %539 = vmatpush.msra.mxu0 0.0
    %540 = vmatpush.msra.mxu0 0.0
    %541 = vmatpush.msra.mxu0 0.0
    %542 = vmatpush.msra.mxu0 0.0
    %543 = vmatpush.msra.mxu0 0.0
    %544 = vmatpush.msra.mxu0 0.0
    %545 = vmatpush.msra.mxu0 0.0
    %546 = vmatpush.msra.mxu0 0.0
    %547 = vmatpush.msra.mxu0 0.0
    %548 = vmatpush.msra.mxu0 0.0
    %549 = vmatpush.msra.mxu0 0.0
    %550 = vmatpush.msra.mxu0 0.0
    %551 = vmatpush.msra.mxu0 0.0
    %552 = vmatpush.msra.mxu0 0.0
    %553 = vmatpush.msra.mxu0 %v533
    %554 = vmatmul.f32.gmra.mxu0 %v536
    %v555 = vpop.f32.mrf.mxu0
    %v556 = vadd.f32 0.0, %v555
    %557 = vdwg.mxu0
    %559 = vrot.lane.b32.xlu0 %v426, 8
    %v560 = vpop.permute.xlu0 %559
    %563 = vrot.lane.b32.xlu0 %v491, 16
    %v564 = vpop.permute.xlu0 %563
    %567 = vrot.lane.b32.xlu0 %v556, 24
    %v568 = vpop.permute.xlu0 %567
    %v570 = vsel %vm301, %v361, %v560
    %vm571 = vcmask 130048
    %v572 = vsel %vm571, %v570, %v564
    %vm573 = vcmask 195584
    %v574 = vsel %vm573, %v572, %v568
    %576 = vrot.lane.b32.xlu0 %v296, 96
    %v577 = vpop.permute.xlu0 %576
    %v578 = vsel %vm301, %v296, 0
    %v580 = vsel %vm301, %v577, 0
    %582 = vmatpush.xpose.msra.mxu0 0.0
    %583 = vmatpush.xpose.msra.mxu0 0.0
    %584 = vmatpush.xpose.msra.mxu0 0.0
    %585 = vmatpush.xpose.msra.mxu0 0.0
    %586 = vmatpush.xpose.msra.mxu0 0.0
    %587 = vmatpush.xpose.msra.mxu0 0.0
    %588 = vmatpush.xpose.msra.mxu0 0.0
    %589 = vmatpush.xpose.msra.mxu0 0.0
    %590 = vmatpush.xpose.msra.mxu0 0.0
    %591 = vmatpush.xpose.msra.mxu0 0.0
    %592 = vmatpush.xpose.msra.mxu0 0.0
    %593 = vmatpush.xpose.msra.mxu0 0.0
    %594 = vmatpush.xpose.msra.mxu0 0.0
    %595 = vmatpush.xpose.msra.mxu0 0.0
    %596 = vmatpush.xpose.msra.mxu0 0.0
    %597 = vmatpush.xpose.msra.mxu0 %v580
    %598 = vmatmul.f32.gmra.mxu0 %v578
    %v599 = vpop.f32.mrf.mxu0
    %v600 = vadd.f32 %v190, %v599
    %601 = vdwg.mxu0
    %v602 = vsel %vm301, %v600, -inf
    %603 = vmax.xlane.f32.xlu0 %v602
    %v604 = vpop.xlane.xlu0 %603
    %v605 = vsub.f32 %v600, %v604
    %v606 = vmul.f32 %v605, 1.442695
    %v607 = vpow.pop %v606
    %v608 = vsel %vm301, %v607, 0.0
    %609 = vadd.xlane.f32.xlu0 %v608
    %v610 = vpop.xlane.xlu0 %609
    %v611 = vrcp.pop %v610
    %v612 = vmul.f32 %v607, %v611
    %613 = vrot.lane.b32.xlu0 %v296, 64
    %v614 = vpop.permute.xlu0 %613
    %v617 = vsel %vm301, %v612, 0
    %619 = vmatpush.msra.mxu0 0.0
    %620 = vmatpush.msra.mxu0 0.0
    %621 = vmatpush.msra.mxu0 0.0
    %622 = vmatpush.msra.mxu0 0.0
    %623 = vmatpush.msra.mxu0 0.0
    %624 = vmatpush.msra.mxu0 0.0
    %625 = vmatpush.msra.mxu0 0.0
    %626 = vmatpush.msra.mxu0 0.0
    %627 = vmatpush.msra.mxu0 0.0
    %628 = vmatpush.msra.mxu0 0.0
    %629 = vmatpush.msra.mxu0 0.0
    %630 = vmatpush.msra.mxu0 0.0
    %631 = vmatpush.msra.mxu0 0.0
    %632 = vmatpush.msra.mxu0 0.0
    %633 = vmatpush.msra.mxu0 0.0
    %634 = vmatpush.msra.mxu0 %v614
    %635 = vmatmul.f32.gmra.mxu0 %v617
    %v636 = vpop.f32.mrf.mxu0
    %v637 = vadd.f32 0.0, %v636
    %638 = vdwg.mxu0
    %639 = vrot.lane.b32.xlu0 %v296, 120
    %v640 = vpop.permute.xlu0 %639
    %641 = vrot.lane.b32.xlu0 %v296, 88
    %v642 = vpop.permute.xlu0 %641
    %v643 = vsel %vm301, %v640, 0
    %v645 = vsel %vm301, %v642, 0
    %647 = vmatpush.xpose.msra.mxu0 0.0
    %648 = vmatpush.xpose.msra.mxu0 0.0
    %649 = vmatpush.xpose.msra.mxu0 0.0
    %650 = vmatpush.xpose.msra.mxu0 0.0
    %651 = vmatpush.xpose.msra.mxu0 0.0
    %652 = vmatpush.xpose.msra.mxu0 0.0
    %653 = vmatpush.xpose.msra.mxu0 0.0
    %654 = vmatpush.xpose.msra.mxu0 0.0
    %655 = vmatpush.xpose.msra.mxu0 0.0
    %656 = vmatpush.xpose.msra.mxu0 0.0
    %657 = vmatpush.xpose.msra.mxu0 0.0
    %658 = vmatpush.xpose.msra.mxu0 0.0
    %659 = vmatpush.xpose.msra.mxu0 0.0
    %660 = vmatpush.xpose.msra.mxu0 0.0
    %661 = vmatpush.xpose.msra.mxu0 0.0
    %662 = vmatpush.xpose.msra.mxu0 %v645
    %663 = vmatmul.f32.gmra.mxu0 %v643
    %v664 = vpop.f32.mrf.mxu0
    %v665 = vadd.f32 %v190, %v664
    %666 = vdwg.mxu0
    %v667 = vsel %vm301, %v665, -inf
    %668 = vmax.xlane.f32.xlu0 %v667
    %v669 = vpop.xlane.xlu0 %668
    %v670 = vsub.f32 %v665, %v669
    %v671 = vmul.f32 %v670, 1.442695
    %v672 = vpow.pop %v671
    %v673 = vsel %vm301, %v672, 0.0
    %674 = vadd.xlane.f32.xlu0 %v673
    %v675 = vpop.xlane.xlu0 %674
    %v676 = vrcp.pop %v675
    %v677 = vmul.f32 %v672, %v676
    %678 = vrot.lane.b32.xlu0 %v296, 56
    %v679 = vpop.permute.xlu0 %678
    %v682 = vsel %vm301, %v677, 0
    %684 = vmatpush.msra.mxu0 0.0
    %685 = vmatpush.msra.mxu0 0.0
    %686 = vmatpush.msra.mxu0 0.0
    %687 = vmatpush.msra.mxu0 0.0
    %688 = vmatpush.msra.mxu0 0.0
    %689 = vmatpush.msra.mxu0 0.0
    %690 = vmatpush.msra.mxu0 0.0
    %691 = vmatpush.msra.mxu0 0.0
    %692 = vmatpush.msra.mxu0 0.0
    %693 = vmatpush.msra.mxu0 0.0
    %694 = vmatpush.msra.mxu0 0.0
    %695 = vmatpush.msra.mxu0 0.0
    %696 = vmatpush.msra.mxu0 0.0
    %697 = vmatpush.msra.mxu0 0.0
    %698 = vmatpush.msra.mxu0 0.0
    %699 = vmatpush.msra.mxu0 %v679
    %700 = vmatmul.f32.gmra.mxu0 %v682
    %v701 = vpop.f32.mrf.mxu0
    %v702 = vadd.f32 0.0, %v701
    %703 = vdwg.mxu0
    %704 = vrot.lane.b32.xlu0 %v296, 112
    %v705 = vpop.permute.xlu0 %704
    %706 = vrot.lane.b32.xlu0 %v296, 80
    %v707 = vpop.permute.xlu0 %706
    %v708 = vsel %vm301, %v705, 0
    %v710 = vsel %vm301, %v707, 0
    %712 = vmatpush.xpose.msra.mxu0 0.0
    %713 = vmatpush.xpose.msra.mxu0 0.0
    %714 = vmatpush.xpose.msra.mxu0 0.0
    %715 = vmatpush.xpose.msra.mxu0 0.0
    %716 = vmatpush.xpose.msra.mxu0 0.0
    %717 = vmatpush.xpose.msra.mxu0 0.0
    %718 = vmatpush.xpose.msra.mxu0 0.0
    %719 = vmatpush.xpose.msra.mxu0 0.0
    %720 = vmatpush.xpose.msra.mxu0 0.0
    %721 = vmatpush.xpose.msra.mxu0 0.0
    %722 = vmatpush.xpose.msra.mxu0 0.0
    %723 = vmatpush.xpose.msra.mxu0 0.0
    %724 = vmatpush.xpose.msra.mxu0 0.0
    %725 = vmatpush.xpose.msra.mxu0 0.0
    %726 = vmatpush.xpose.msra.mxu0 0.0
    %727 = vmatpush.xpose.msra.mxu0 %v710
    %728 = vmatmul.f32.gmra.mxu0 %v708
    %v729 = vpop.f32.mrf.mxu0
    %v730 = vadd.f32 %v190, %v729
    %731 = vdwg.mxu0
    %v732 = vsel %vm301, %v730, -inf
    %733 = vmax.xlane.f32.xlu0 %v732
    %v734 = vpop.xlane.xlu0 %733
    %v735 = vsub.f32 %v730, %v734
    %v736 = vmul.f32 %v735, 1.442695
    %v737 = vpow.pop %v736
    %v738 = vsel %vm301, %v737, 0.0
    %739 = vadd.xlane.f32.xlu0 %v738
    %v740 = vpop.xlane.xlu0 %739
    %v741 = vrcp.pop %v740
    %v742 = vmul.f32 %v737, %v741
    %743 = vrot.lane.b32.xlu0 %v296, 48
    %v744 = vpop.permute.xlu0 %743
    %v747 = vsel %vm301, %v742, 0
    %749 = vmatpush.msra.mxu0 0.0
    %750 = vmatpush.msra.mxu0 0.0
    %751 = vmatpush.msra.mxu0 0.0
    %752 = vmatpush.msra.mxu0 0.0
    %753 = vmatpush.msra.mxu0 0.0
    %754 = vmatpush.msra.mxu0 0.0
    %755 = vmatpush.msra.mxu0 0.0
    %756 = vmatpush.msra.mxu0 0.0
    %757 = vmatpush.msra.mxu0 0.0
    %758 = vmatpush.msra.mxu0 0.0
    %759 = vmatpush.msra.mxu0 0.0
    %760 = vmatpush.msra.mxu0 0.0
    %761 = vmatpush.msra.mxu0 0.0
    %762 = vmatpush.msra.mxu0 0.0
    %763 = vmatpush.msra.mxu0 0.0
    %764 = vmatpush.msra.mxu0 %v744
    %765 = vmatmul.f32.gmra.mxu0 %v747
    %v766 = vpop.f32.mrf.mxu0
    %v767 = vadd.f32 0.0, %v766
    %768 = vdwg.mxu0
    %769 = vrot.lane.b32.xlu0 %v296, 104
    %v770 = vpop.permute.xlu0 %769
    %771 = vrot.lane.b32.xlu0 %v296, 72
    %v772 = vpop.permute.xlu0 %771
    %v773 = vsel %vm301, %v770, 0
    %v775 = vsel %vm301, %v772, 0
    %777 = vmatpush.xpose.msra.mxu0 0.0
    %778 = vmatpush.xpose.msra.mxu0 0.0
    %779 = vmatpush.xpose.msra.mxu0 0.0
    %780 = vmatpush.xpose.msra.mxu0 0.0
    %781 = vmatpush.xpose.msra.mxu0 0.0
    %782 = vmatpush.xpose.msra.mxu0 0.0
    %783 = vmatpush.xpose.msra.mxu0 0.0
    %784 = vmatpush.xpose.msra.mxu0 0.0
    %785 = vmatpush.xpose.msra.mxu0 0.0
    %786 = vmatpush.xpose.msra.mxu0 0.0
    %787 = vmatpush.xpose.msra.mxu0 0.0
    %788 = vmatpush.xpose.msra.mxu0 0.0
    %789 = vmatpush.xpose.msra.mxu0 0.0
    %790 = vmatpush.xpose.msra.mxu0 0.0
    %791 = vmatpush.xpose.msra.mxu0 0.0
    %792 = vmatpush.xpose.msra.mxu0 %v775
    %793 = vmatmul.f32.gmra.mxu0 %v773
    %v794 = vpop.f32.mrf.mxu0
    %v795 = vadd.f32 %v190, %v794
    %796 = vdwg.mxu0
    %v797 = vsel %vm301, %v795, -inf
    %798 = vmax.xlane.f32.xlu0 %v797
    %v799 = vpop.xlane.xlu0 %798
    %v800 = vsub.f32 %v795, %v799
    %v801 = vmul.f32 %v800, 1.442695
    %v802 = vpow.pop %v801
    %v803 = vsel %vm301, %v802, 0.0
    %804 = vadd.xlane.f32.xlu0 %v803
    %v805 = vpop.xlane.xlu0 %804
    %v806 = vrcp.pop %v805
    %v807 = vmul.f32 %v802, %v806
    %808 = vrot.lane.b32.xlu0 %v296, 40
    %v809 = vpop.permute.xlu0 %808
    %v812 = vsel %vm301, %v807, 0
    %814 = vmatpush.msra.mxu0 0.0
    %815 = vmatpush.msra.mxu0 0.0
    %816 = vmatpush.msra.mxu0 0.0
    %817 = vmatpush.msra.mxu0 0.0
    %818 = vmatpush.msra.mxu0 0.0
    %819 = vmatpush.msra.mxu0 0.0
    %820 = vmatpush.msra.mxu0 0.0
    %821 = vmatpush.msra.mxu0 0.0
    %822 = vmatpush.msra.mxu0 0.0
    %823 = vmatpush.msra.mxu0 0.0
    %824 = vmatpush.msra.mxu0 0.0
    %825 = vmatpush.msra.mxu0 0.0
    %826 = vmatpush.msra.mxu0 0.0
    %827 = vmatpush.msra.mxu0 0.0
    %828 = vmatpush.msra.mxu0 0.0
    %829 = vmatpush.msra.mxu0 %v809
    %830 = vmatmul.f32.gmra.mxu0 %v812
    %v831 = vpop.f32.mrf.mxu0
    %v832 = vadd.f32 0.0, %v831
    %833 = vdwg.mxu0
    %835 = vrot.lane.b32.xlu0 %v702, 8
    %v836 = vpop.permute.xlu0 %835
    %839 = vrot.lane.b32.xlu0 %v767, 16
    %v840 = vpop.permute.xlu0 %839
    %843 = vrot.lane.b32.xlu0 %v832, 24
    %v844 = vpop.permute.xlu0 %843
    %v846 = vsel %vm301, %v637, %v836
    %v847 = vsel %vm571, %v846, %v840
    %v848 = vsel %vm573, %v847, %v844
    %v850 = vperm.slane %v265, 0
    %v853 = vsel %vm194, %v574, 0
    %v856 = vsel %vm194, %v848, 0
    %858 = vmatpush.msra.mxu0 0.0
    %859 = vmatpush.msra.mxu0 0.0
    %860 = vmatpush.msra.mxu0 0.0
    %861 = vmatpush.msra.mxu0 0.0
    %862 = vmatpush.msra.mxu0 0.0
    %863 = vmatpush.msra.mxu0 0.0
    %864 = vmatpush.msra.mxu0 0.0
    %865 = vmatpush.msra.mxu0 0.0
    %866 = vmatpush.msra.mxu0 0.0
    %867 = vmatpush.msra.mxu0 0.0
    %868 = vmatpush.msra.mxu0 0.0
    %869 = vmatpush.msra.mxu0 0.0
    %870 = vmatpush.msra.mxu0 %v264
    %871 = vmatpush.msra.mxu0 %v263
    %872 = vmatpush.msra.mxu0 %v262
    %873 = vmatpush.msra.mxu0 %v261
    %874 = vmatmul.f32.gmra.mxu0 %v853
    %v875 = vpop.f32.mrf.mxu0
    %v876 = vadd.f32 %v850, %v875
    %877 = vmatmul.f32.gmra.mxu0 %v856
    %v878 = vpop.f32.mrf.mxu0
    %v879 = vadd.f32 %v850, %v878
    %880 = vdwg.mxu0
    %v881 = vadd.f32 %v186, %v876
    %v882 = vadd.f32 %v187, %v879
    %v883 = vld [vmem:[%s10] sm:$0x1]
    %v884 = vld [vmem:[%s11] sm:$0x1]
    %v885 = vsel %vm194, %v881, 0.0
    %886 = vadd.xlane.f32.xlu0 %v885
    %v887 = vpop.xlane.xlu0 %886
    %v888 = vsel %vm194, %v882, 0.0
    %889 = vadd.xlane.f32.xlu0 %v888
    %v890 = vpop.xlane.xlu0 %889
    %v891 = vmul.f32 %v887, %v207
    %v892 = vmul.f32 %v890, %v207
    %v893 = vsub.f32 %v881, %v891
    %v894 = vsub.f32 %v882, %v892
    %v895 = vmul.f32 %v893, %v893
    %v896 = vmul.f32 %v894, %v894
    %v897 = vsel %vm194, %v895, 0.0
    %898 = vadd.xlane.f32.xlu0 %v897
    %v899 = vpop.xlane.xlu0 %898
    %v900 = vsel %vm194, %v896, 0.0
    %901 = vadd.xlane.f32.xlu0 %v900
    %v902 = vpop.xlane.xlu0 %901
    %v903 = vmul.f32 %v899, %v207
    %v904 = vmul.f32 %v902, %v207
    %v905 = vadd.f32 %v903, 1e-05
    %v906 = vadd.f32 %v904, 1e-05
    %v907 = vrsqrt.pop %v905
    %v908 = vmul.f32 %v907, %v905
    %v909 = vmul.f32 %v908, %v907
    %v910 = vmul.f32 0.5, %v909
    %v911 = vsub.f32 1.5, %v910
    %v912 = vmul.f32 %v907, %v911
    %vm913 = vweird.f32 %v905
    %vm914 = vweird.f32 %v907
    %vm915 = vmor %vm913, %vm914
    %v916 = vsel %vm915, %v907, %v912
    %v917 = vrsqrt.pop %v906
    %v918 = vmul.f32 %v917, %v906
    %v919 = vmul.f32 %v918, %v917
    %v920 = vmul.f32 0.5, %v919
    %v921 = vsub.f32 1.5, %v920
    %v922 = vmul.f32 %v917, %v921
    %vm923 = vweird.f32 %v906
    %vm924 = vweird.f32 %v917
    %vm925 = vmor %vm923, %vm924
    %v926 = vsel %vm925, %v917, %v922
    %v927 = vmul.f32 %v893, %v916
    %v928 = vmul.f32 %v894, %v926
    %v930 = vperm.slane %v883, 0
    %v932 = vmul.f32 %v927, %v930
    %v933 = vmul.f32 %v928, %v930
    %v935 = vperm.slane %v884, 0
    %v937 = vadd.f32 %v932, %v935
    %v938 = vadd.f32 %v933, %v935
    %v939 = vld [vmem:[%s12] sm:$0xff]
    %v940 = vld [vmem:[%s12 + $0x8] sm:$0xff]
    %v941 = vld [vmem:[%s12 + $0x10] sm:$0xff]
    %v942 = vld [vmem:[%s12 + $0x18] sm:$0xff]
    %v943 = vld [vmem:[%s13] sm:$0x1]
    %v944 = vld [vmem:[#allocation10] sm:$0xff]
    %v945 = vld [vmem:[#allocation10 + $0x8] sm:$0xff]
    %v946 = vld [vmem:[#allocation10 + $0x10] sm:$0xff]
    %v947 = vld [vmem:[#allocation10 + $0x18] sm:$0xff]
    %v948 = vld [vmem:[%s15] sm:$0x1]
    %v950 = vperm.slane %v943, 0
    %v953 = vsel %vm194, %v937, 0
    %v956 = vsel %vm194, %v938, 0
    %958 = vmatpush.msra.mxu0 0.0
    %959 = vmatpush.msra.mxu0 0.0
    %960 = vmatpush.msra.mxu0 0.0
    %961 = vmatpush.msra.mxu0 0.0
    %962 = vmatpush.msra.mxu0 0.0
    %963 = vmatpush.msra.mxu0 0.0
    %964 = vmatpush.msra.mxu0 0.0
    %965 = vmatpush.msra.mxu0 0.0
    %966 = vmatpush.msra.mxu0 0.0
    %967 = vmatpush.msra.mxu0 0.0
    %968 = vmatpush.msra.mxu0 0.0
    %969 = vmatpush.msra.mxu0 0.0
    %970 = vmatpush.msra.mxu0 %v942
    %971 = vmatpush.msra.mxu0 %v941
    %972 = vmatpush.msra.mxu0 %v940
    %973 = vmatpush.msra.mxu0 %v939
    %974 = vmatmul.f32.gmra.mxu0 %v953
    %v975 = vpop.f32.mrf.mxu0
    %v976 = vadd.f32 %v950, %v975
    %977 = vmatmul.f32.gmra.mxu0 %v956
    %v978 = vpop.f32.mrf.mxu0
    %v979 = vadd.f32 %v950, %v978
    %980 = vdwg.mxu0
    %985 = vrot.lane.b32.xlu0 %v939, 96
    %v986 = vpop.permute.xlu0 %985
    %987 = vrot.lane.b32.xlu0 %v940, 96
    %v988 = vpop.permute.xlu0 %987
    %989 = vrot.lane.b32.xlu0 %v941, 96
    %v990 = vpop.permute.xlu0 %989
    %991 = vrot.lane.b32.xlu0 %v942, 96
    %v992 = vpop.permute.xlu0 %991
    %997 = vrot.lane.b32.xlu0 %v950, 96
    %v998 = vpop.permute.xlu0 %997
    %v1001 = vsel %vm194, %v188, 0
    %v1004 = vsel %vm194, %v189, 0
    %1006 = vmatpush.msra.mxu0 0.0
    %1007 = vmatpush.msra.mxu0 0.0
    %1008 = vmatpush.msra.mxu0 0.0
    %1009 = vmatpush.msra.mxu0 0.0
    %1010 = vmatpush.msra.mxu0 0.0
    %1011 = vmatpush.msra.mxu0 0.0
    %1012 = vmatpush.msra.mxu0 0.0
    %1013 = vmatpush.msra.mxu0 0.0
    %1014 = vmatpush.msra.mxu0 0.0
    %1015 = vmatpush.msra.mxu0 0.0
    %1016 = vmatpush.msra.mxu0 0.0
    %1017 = vmatpush.msra.mxu0 0.0
    %1018 = vmatpush.msra.mxu0 %v992
    %1019 = vmatpush.msra.mxu0 %v990
    %1020 = vmatpush.msra.mxu0 %v988
    %1021 = vmatpush.msra.mxu0 %v986
    %1022 = vmatmul.f32.gmra.mxu0 %v1001
    %v1023 = vpop.f32.mrf.mxu0
    %v1024 = vadd.f32 %v998, %v1023
    %1025 = vmatmul.f32.gmra.mxu0 %v1004
    %v1026 = vpop.f32.mrf.mxu0
    %v1027 = vadd.f32 %v998, %v1026
    %1028 = vdwg.mxu0
    %v1030 = vsel %vm301, %v976, 0
    %v1033 = vsel %vm301, %v1024, 0
    %1035 = vmatpush.xpose.msra.mxu0 0.0
    %1036 = vmatpush.xpose.msra.mxu0 0.0
    %1037 = vmatpush.xpose.msra.mxu0 0.0
    %1038 = vmatpush.xpose.msra.mxu0 0.0
    %1039 = vmatpush.xpose.msra.mxu0 0.0
    %1040 = vmatpush.xpose.msra.mxu0 0.0
    %1041 = vmatpush.xpose.msra.mxu0 0.0
    %1042 = vmatpush.xpose.msra.mxu0 0.0
    %1043 = vmatpush.xpose.msra.mxu0 0.0
    %1044 = vmatpush.xpose.msra.mxu0 0.0
    %1045 = vmatpush.xpose.msra.mxu0 0.0
    %1046 = vmatpush.xpose.msra.mxu0 0.0
    %1047 = vmatpush.xpose.msra.mxu0 0.0
    %1048 = vmatpush.xpose.msra.mxu0 0.0
    %1049 = vmatpush.xpose.msra.mxu0 0.0
    %1050 = vmatpush.xpose.msra.mxu0 %v1033
    %1051 = vmatmul.f32.gmra.mxu0 %v1030
    %v1052 = vpop.f32.mrf.mxu0
    %v1053 = vadd.f32 %v191, %v1052
    %1054 = vdwg.mxu0
    %v1055 = vsel %vm301, %v1053, -inf
    %1056 = vmax.xlane.f32.xlu0 %v1055
    %v1057 = vpop.xlane.xlu0 %1056
    %v1058 = vsub.f32 %v1053, %v1057
    %v1059 = vmul.f32 %v1058, 1.442695
    %v1060 = vpow.pop %v1059
    %v1061 = vsel %vm301, %v1060, 0.0
    %1062 = vadd.xlane.f32.xlu0 %v1061
    %v1063 = vpop.xlane.xlu0 %1062
    %v1064 = vrcp.pop %v1063
    %v1065 = vmul.f32 %v1060, %v1064
    %1066 = vrot.lane.b32.xlu0 %v1024, 96
    %v1067 = vpop.permute.xlu0 %1066
    %v1070 = vsel %vm301, %v1065, 0
    %1072 = vmatpush.msra.mxu0 0.0
    %1073 = vmatpush.msra.mxu0 0.0
    %1074 = vmatpush.msra.mxu0 0.0
    %1075 = vmatpush.msra.mxu0 0.0
    %1076 = vmatpush.msra.mxu0 0.0
    %1077 = vmatpush.msra.mxu0 0.0
    %1078 = vmatpush.msra.mxu0 0.0
    %1079 = vmatpush.msra.mxu0 0.0
    %1080 = vmatpush.msra.mxu0 0.0
    %1081 = vmatpush.msra.mxu0 0.0
    %1082 = vmatpush.msra.mxu0 0.0
    %1083 = vmatpush.msra.mxu0 0.0
    %1084 = vmatpush.msra.mxu0 0.0
    %1085 = vmatpush.msra.mxu0 0.0
    %1086 = vmatpush.msra.mxu0 0.0
    %1087 = vmatpush.msra.mxu0 %v1067
    %1088 = vmatmul.f32.gmra.mxu0 %v1070
    %v1089 = vpop.f32.mrf.mxu0
    %v1090 = vadd.f32 0.0, %v1089
    %1091 = vdwg.mxu0
    %1092 = vrot.lane.b32.xlu0 %v976, 120
    %v1093 = vpop.permute.xlu0 %1092
    %1094 = vrot.lane.b32.xlu0 %v1024, 120
    %v1095 = vpop.permute.xlu0 %1094
    %v1096 = vsel %vm301, %v1093, 0
    %v1098 = vsel %vm301, %v1095, 0
    %1100 = vmatpush.xpose.msra.mxu0 0.0
    %1101 = vmatpush.xpose.msra.mxu0 0.0
    %1102 = vmatpush.xpose.msra.mxu0 0.0
    %1103 = vmatpush.xpose.msra.mxu0 0.0
    %1104 = vmatpush.xpose.msra.mxu0 0.0
    %1105 = vmatpush.xpose.msra.mxu0 0.0
    %1106 = vmatpush.xpose.msra.mxu0 0.0
    %1107 = vmatpush.xpose.msra.mxu0 0.0
    %1108 = vmatpush.xpose.msra.mxu0 0.0
    %1109 = vmatpush.xpose.msra.mxu0 0.0
    %1110 = vmatpush.xpose.msra.mxu0 0.0
    %1111 = vmatpush.xpose.msra.mxu0 0.0
    %1112 = vmatpush.xpose.msra.mxu0 0.0
    %1113 = vmatpush.xpose.msra.mxu0 0.0
    %1114 = vmatpush.xpose.msra.mxu0 0.0
    %1115 = vmatpush.xpose.msra.mxu0 %v1098
    %1116 = vmatmul.f32.gmra.mxu0 %v1096
    %v1117 = vpop.f32.mrf.mxu0
    %v1118 = vadd.f32 %v191, %v1117
    %1119 = vdwg.mxu0
    %v1120 = vsel %vm301, %v1118, -inf
    %1121 = vmax.xlane.f32.xlu0 %v1120
    %v1122 = vpop.xlane.xlu0 %1121
    %v1123 = vsub.f32 %v1118, %v1122
    %v1124 = vmul.f32 %v1123, 1.442695
    %v1125 = vpow.pop %v1124
    %v1126 = vsel %vm301, %v1125, 0.0
    %1127 = vadd.xlane.f32.xlu0 %v1126
    %v1128 = vpop.xlane.xlu0 %1127
    %v1129 = vrcp.pop %v1128
    %v1130 = vmul.f32 %v1125, %v1129
    %1131 = vrot.lane.b32.xlu0 %v1024, 88
    %v1132 = vpop.permute.xlu0 %1131
    %v1135 = vsel %vm301, %v1130, 0
    %1137 = vmatpush.msra.mxu0 0.0
    %1138 = vmatpush.msra.mxu0 0.0
    %1139 = vmatpush.msra.mxu0 0.0
    %1140 = vmatpush.msra.mxu0 0.0
    %1141 = vmatpush.msra.mxu0 0.0
    %1142 = vmatpush.msra.mxu0 0.0
    %1143 = vmatpush.msra.mxu0 0.0
    %1144 = vmatpush.msra.mxu0 0.0
    %1145 = vmatpush.msra.mxu0 0.0
    %1146 = vmatpush.msra.mxu0 0.0
    %1147 = vmatpush.msra.mxu0 0.0
    %1148 = vmatpush.msra.mxu0 0.0
    %1149 = vmatpush.msra.mxu0 0.0
    %1150 = vmatpush.msra.mxu0 0.0
    %1151 = vmatpush.msra.mxu0 0.0
    %1152 = vmatpush.msra.mxu0 %v1132
    %1153 = vmatmul.f32.gmra.mxu0 %v1135
    %v1154 = vpop.f32.mrf.mxu0
    %v1155 = vadd.f32 0.0, %v1154
    %1156 = vdwg.mxu0
    %1157 = vrot.lane.b32.xlu0 %v976, 112
    %v1158 = vpop.permute.xlu0 %1157
    %1159 = vrot.lane.b32.xlu0 %v1024, 112
    %v1160 = vpop.permute.xlu0 %1159
    %v1161 = vsel %vm301, %v1158, 0
    %v1163 = vsel %vm301, %v1160, 0
    %1165 = vmatpush.xpose.msra.mxu0 0.0
    %1166 = vmatpush.xpose.msra.mxu0 0.0
    %1167 = vmatpush.xpose.msra.mxu0 0.0
    %1168 = vmatpush.xpose.msra.mxu0 0.0
    %1169 = vmatpush.xpose.msra.mxu0 0.0
    %1170 = vmatpush.xpose.msra.mxu0 0.0
    %1171 = vmatpush.xpose.msra.mxu0 0.0
    %1172 = vmatpush.xpose.msra.mxu0 0.0
    %1173 = vmatpush.xpose.msra.mxu0 0.0
    %1174 = vmatpush.xpose.msra.mxu0 0.0
    %1175 = vmatpush.xpose.msra.mxu0 0.0
    %1176 = vmatpush.xpose.msra.mxu0 0.0
    %1177 = vmatpush.xpose.msra.mxu0 0.0
    %1178 = vmatpush.xpose.msra.mxu0 0.0
    %1179 = vmatpush.xpose.msra.mxu0 0.0
    %1180 = vmatpush.xpose.msra.mxu0 %v1163
    %1181 = vmatmul.f32.gmra.mxu0 %v1161
    %v1182 = vpop.f32.mrf.mxu0
    %v1183 = vadd.f32 %v191, %v1182
    %1184 = vdwg.mxu0
    %v1185 = vsel %vm301, %v1183, -inf
    %1186 = vmax.xlane.f32.xlu0 %v1185
    %v1187 = vpop.xlane.xlu0 %1186
    %v1188 = vsub.f32 %v1183, %v1187
    %v1189 = vmul.f32 %v1188, 1.442695
    %v1190 = vpow.pop %v1189
    %v1191 = vsel %vm301, %v1190, 0.0
    %1192 = vadd.xlane.f32.xlu0 %v1191
    %v1193 = vpop.xlane.xlu0 %1192
    %v1194 = vrcp.pop %v1193
    %v1195 = vmul.f32 %v1190, %v1194
    %1196 = vrot.lane.b32.xlu0 %v1024, 80
    %v1197 = vpop.permute.xlu0 %1196
    %v1200 = vsel %vm301, %v1195, 0
    %1202 = vmatpush.msra.mxu0 0.0
    %1203 = vmatpush.msra.mxu0 0.0
    %1204 = vmatpush.msra.mxu0 0.0
    %1205 = vmatpush.msra.mxu0 0.0
    %1206 = vmatpush.msra.mxu0 0.0
    %1207 = vmatpush.msra.mxu0 0.0
    %1208 = vmatpush.msra.mxu0 0.0
    %1209 = vmatpush.msra.mxu0 0.0
    %1210 = vmatpush.msra.mxu0 0.0
    %1211 = vmatpush.msra.mxu0 0.0
    %1212 = vmatpush.msra.mxu0 0.0
    %1213 = vmatpush.msra.mxu0 0.0
    %1214 = vmatpush.msra.mxu0 0.0
    %1215 = vmatpush.msra.mxu0 0.0
    %1216 = vmatpush.msra.mxu0 0.0
    %1217 = vmatpush.msra.mxu0 %v1197
    %1218 = vmatmul.f32.gmra.mxu0 %v1200
    %v1219 = vpop.f32.mrf.mxu0
    %v1220 = vadd.f32 0.0, %v1219
    %1221 = vdwg.mxu0
    %1222 = vrot.lane.b32.xlu0 %v976, 104
    %v1223 = vpop.permute.xlu0 %1222
    %1224 = vrot.lane.b32.xlu0 %v1024, 104
    %v1225 = vpop.permute.xlu0 %1224
    %v1226 = vsel %vm301, %v1223, 0
    %v1228 = vsel %vm301, %v1225, 0
    %1230 = vmatpush.xpose.msra.mxu0 0.0
    %1231 = vmatpush.xpose.msra.mxu0 0.0
    %1232 = vmatpush.xpose.msra.mxu0 0.0
    %1233 = vmatpush.xpose.msra.mxu0 0.0
    %1234 = vmatpush.xpose.msra.mxu0 0.0
    %1235 = vmatpush.xpose.msra.mxu0 0.0
    %1236 = vmatpush.xpose.msra.mxu0 0.0
    %1237 = vmatpush.xpose.msra.mxu0 0.0
    %1238 = vmatpush.xpose.msra.mxu0 0.0
    %1239 = vmatpush.xpose.msra.mxu0 0.0
    %1240 = vmatpush.xpose.msra.mxu0 0.0
    %1241 = vmatpush.xpose.msra.mxu0 0.0
    %1242 = vmatpush.xpose.msra.mxu0 0.0
    %1243 = vmatpush.xpose.msra.mxu0 0.0
    %1244 = vmatpush.xpose.msra.mxu0 0.0
    %1245 = vmatpush.xpose.msra.mxu0 %v1228
    %1246 = vmatmul.f32.gmra.mxu0 %v1226
    %v1247 = vpop.f32.mrf.mxu0
    %v1248 = vadd.f32 %v191, %v1247
    %1249 = vdwg.mxu0
    %v1250 = vsel %vm301, %v1248, -inf
    %1251 = vmax.xlane.f32.xlu0 %v1250
    %v1252 = vpop.xlane.xlu0 %1251
    %v1253 = vsub.f32 %v1248, %v1252
    %v1254 = vmul.f32 %v1253, 1.442695
    %v1255 = vpow.pop %v1254
    %v1256 = vsel %vm301, %v1255, 0.0
    %1257 = vadd.xlane.f32.xlu0 %v1256
    %v1258 = vpop.xlane.xlu0 %1257
    %v1259 = vrcp.pop %v1258
    %v1260 = vmul.f32 %v1255, %v1259
    %1261 = vrot.lane.b32.xlu0 %v1024, 72
    %v1262 = vpop.permute.xlu0 %1261
    %v1265 = vsel %vm301, %v1260, 0
    %1267 = vmatpush.msra.mxu0 0.0
    %1268 = vmatpush.msra.mxu0 0.0
    %1269 = vmatpush.msra.mxu0 0.0
    %1270 = vmatpush.msra.mxu0 0.0
    %1271 = vmatpush.msra.mxu0 0.0
    %1272 = vmatpush.msra.mxu0 0.0
    %1273 = vmatpush.msra.mxu0 0.0
    %1274 = vmatpush.msra.mxu0 0.0
    %1275 = vmatpush.msra.mxu0 0.0
    %1276 = vmatpush.msra.mxu0 0.0
    %1277 = vmatpush.msra.mxu0 0.0
    %1278 = vmatpush.msra.mxu0 0.0
    %1279 = vmatpush.msra.mxu0 0.0
    %1280 = vmatpush.msra.mxu0 0.0
    %1281 = vmatpush.msra.mxu0 0.0
    %1282 = vmatpush.msra.mxu0 %v1262
    %1283 = vmatmul.f32.gmra.mxu0 %v1265
    %v1284 = vpop.f32.mrf.mxu0
    %v1285 = vadd.f32 0.0, %v1284
    %1286 = vdwg.mxu0
    %1288 = vrot.lane.b32.xlu0 %v1155, 8
    %v1289 = vpop.permute.xlu0 %1288
    %1292 = vrot.lane.b32.xlu0 %v1220, 16
    %v1293 = vpop.permute.xlu0 %1292
    %1296 = vrot.lane.b32.xlu0 %v1285, 24
    %v1297 = vpop.permute.xlu0 %1296
    %v1299 = vsel %vm301, %v1090, %v1289
    %v1300 = vsel %vm571, %v1299, %v1293
    %v1301 = vsel %vm573, %v1300, %v1297
    %v1303 = vsel %vm301, %v979, 0
    %v1306 = vsel %vm301, %v1027, 0
    %1308 = vmatpush.xpose.msra.mxu0 0.0
    %1309 = vmatpush.xpose.msra.mxu0 0.0
    %1310 = vmatpush.xpose.msra.mxu0 0.0
    %1311 = vmatpush.xpose.msra.mxu0 0.0
    %1312 = vmatpush.xpose.msra.mxu0 0.0
    %1313 = vmatpush.xpose.msra.mxu0 0.0
    %1314 = vmatpush.xpose.msra.mxu0 0.0
    %1315 = vmatpush.xpose.msra.mxu0 0.0
    %1316 = vmatpush.xpose.msra.mxu0 0.0
    %1317 = vmatpush.xpose.msra.mxu0 0.0
    %1318 = vmatpush.xpose.msra.mxu0 0.0
    %1319 = vmatpush.xpose.msra.mxu0 0.0
    %1320 = vmatpush.xpose.msra.mxu0 0.0
    %1321 = vmatpush.xpose.msra.mxu0 0.0
    %1322 = vmatpush.xpose.msra.mxu0 0.0
    %1323 = vmatpush.xpose.msra.mxu0 %v1306
    %1324 = vmatmul.f32.gmra.mxu0 %v1303
    %v1325 = vpop.f32.mrf.mxu0
    %v1326 = vadd.f32 %v191, %v1325
    %1327 = vdwg.mxu0
    %v1328 = vsel %vm301, %v1326, -inf
    %1329 = vmax.xlane.f32.xlu0 %v1328
    %v1330 = vpop.xlane.xlu0 %1329
    %v1331 = vsub.f32 %v1326, %v1330
    %v1332 = vmul.f32 %v1331, 1.442695
    %v1333 = vpow.pop %v1332
    %v1334 = vsel %vm301, %v1333, 0.0
    %1335 = vadd.xlane.f32.xlu0 %v1334
    %v1336 = vpop.xlane.xlu0 %1335
    %v1337 = vrcp.pop %v1336
    %v1338 = vmul.f32 %v1333, %v1337
    %1339 = vrot.lane.b32.xlu0 %v1027, 96
    %v1340 = vpop.permute.xlu0 %1339
    %v1343 = vsel %vm301, %v1338, 0
    %1345 = vmatpush.msra.mxu0 0.0
    %1346 = vmatpush.msra.mxu0 0.0
    %1347 = vmatpush.msra.mxu0 0.0
    %1348 = vmatpush.msra.mxu0 0.0
    %1349 = vmatpush.msra.mxu0 0.0
    %1350 = vmatpush.msra.mxu0 0.0
    %1351 = vmatpush.msra.mxu0 0.0
    %1352 = vmatpush.msra.mxu0 0.0
    %1353 = vmatpush.msra.mxu0 0.0
    %1354 = vmatpush.msra.mxu0 0.0
    %1355 = vmatpush.msra.mxu0 0.0
    %1356 = vmatpush.msra.mxu0 0.0
    %1357 = vmatpush.msra.mxu0 0.0
    %1358 = vmatpush.msra.mxu0 0.0
    %1359 = vmatpush.msra.mxu0 0.0
    %1360 = vmatpush.msra.mxu0 %v1340
    %1361 = vmatmul.f32.gmra.mxu0 %v1343
    %v1362 = vpop.f32.mrf.mxu0
    %v1363 = vadd.f32 0.0, %v1362
    %1364 = vdwg.mxu0
    %1365 = vrot.lane.b32.xlu0 %v979, 120
    %v1366 = vpop.permute.xlu0 %1365
    %1367 = vrot.lane.b32.xlu0 %v1027, 120
    %v1368 = vpop.permute.xlu0 %1367
    %v1369 = vsel %vm301, %v1366, 0
    %v1371 = vsel %vm301, %v1368, 0
    %1373 = vmatpush.xpose.msra.mxu0 0.0
    %1374 = vmatpush.xpose.msra.mxu0 0.0
    %1375 = vmatpush.xpose.msra.mxu0 0.0
    %1376 = vmatpush.xpose.msra.mxu0 0.0
    %1377 = vmatpush.xpose.msra.mxu0 0.0
    %1378 = vmatpush.xpose.msra.mxu0 0.0
    %1379 = vmatpush.xpose.msra.mxu0 0.0
    %1380 = vmatpush.xpose.msra.mxu0 0.0
    %1381 = vmatpush.xpose.msra.mxu0 0.0
    %1382 = vmatpush.xpose.msra.mxu0 0.0
    %1383 = vmatpush.xpose.msra.mxu0 0.0
    %1384 = vmatpush.xpose.msra.mxu0 0.0
    %1385 = vmatpush.xpose.msra.mxu0 0.0
    %1386 = vmatpush.xpose.msra.mxu0 0.0
    %1387 = vmatpush.xpose.msra.mxu0 0.0
    %1388 = vmatpush.xpose.msra.mxu0 %v1371
    %1389 = vmatmul.f32.gmra.mxu0 %v1369
    %v1390 = vpop.f32.mrf.mxu0
    %v1391 = vadd.f32 %v191, %v1390
    %1392 = vdwg.mxu0
    %v1393 = vsel %vm301, %v1391, -inf
    %1394 = vmax.xlane.f32.xlu0 %v1393
    %v1395 = vpop.xlane.xlu0 %1394
    %v1396 = vsub.f32 %v1391, %v1395
    %v1397 = vmul.f32 %v1396, 1.442695
    %v1398 = vpow.pop %v1397
    %v1399 = vsel %vm301, %v1398, 0.0
    %1400 = vadd.xlane.f32.xlu0 %v1399
    %v1401 = vpop.xlane.xlu0 %1400
    %v1402 = vrcp.pop %v1401
    %v1403 = vmul.f32 %v1398, %v1402
    %1404 = vrot.lane.b32.xlu0 %v1027, 88
    %v1405 = vpop.permute.xlu0 %1404
    %v1408 = vsel %vm301, %v1403, 0
    %1410 = vmatpush.msra.mxu0 0.0
    %1411 = vmatpush.msra.mxu0 0.0
    %1412 = vmatpush.msra.mxu0 0.0
    %1413 = vmatpush.msra.mxu0 0.0
    %1414 = vmatpush.msra.mxu0 0.0
    %1415 = vmatpush.msra.mxu0 0.0
    %1416 = vmatpush.msra.mxu0 0.0
    %1417 = vmatpush.msra.mxu0 0.0
    %1418 = vmatpush.msra.mxu0 0.0
    %1419 = vmatpush.msra.mxu0 0.0
    %1420 = vmatpush.msra.mxu0 0.0
    %1421 = vmatpush.msra.mxu0 0.0
    %1422 = vmatpush.msra.mxu0 0.0
    %1423 = vmatpush.msra.mxu0 0.0
    %1424 = vmatpush.msra.mxu0 0.0
    %1425 = vmatpush.msra.mxu0 %v1405
    %1426 = vmatmul.f32.gmra.mxu0 %v1408
    %v1427 = vpop.f32.mrf.mxu0
    %v1428 = vadd.f32 0.0, %v1427
    %1429 = vdwg.mxu0
    %1430 = vrot.lane.b32.xlu0 %v979, 112
    %v1431 = vpop.permute.xlu0 %1430
    %1432 = vrot.lane.b32.xlu0 %v1027, 112
    %v1433 = vpop.permute.xlu0 %1432
    %v1434 = vsel %vm301, %v1431, 0
    %v1436 = vsel %vm301, %v1433, 0
    %1438 = vmatpush.xpose.msra.mxu0 0.0
    %1439 = vmatpush.xpose.msra.mxu0 0.0
    %1440 = vmatpush.xpose.msra.mxu0 0.0
    %1441 = vmatpush.xpose.msra.mxu0 0.0
    %1442 = vmatpush.xpose.msra.mxu0 0.0
    %1443 = vmatpush.xpose.msra.mxu0 0.0
    %1444 = vmatpush.xpose.msra.mxu0 0.0
    %1445 = vmatpush.xpose.msra.mxu0 0.0
    %1446 = vmatpush.xpose.msra.mxu0 0.0
    %1447 = vmatpush.xpose.msra.mxu0 0.0
    %1448 = vmatpush.xpose.msra.mxu0 0.0
    %1449 = vmatpush.xpose.msra.mxu0 0.0
    %1450 = vmatpush.xpose.msra.mxu0 0.0
    %1451 = vmatpush.xpose.msra.mxu0 0.0
    %1452 = vmatpush.xpose.msra.mxu0 0.0
    %1453 = vmatpush.xpose.msra.mxu0 %v1436
    %1454 = vmatmul.f32.gmra.mxu0 %v1434
    %v1455 = vpop.f32.mrf.mxu0
    %v1456 = vadd.f32 %v191, %v1455
    %1457 = vdwg.mxu0
    %v1458 = vsel %vm301, %v1456, -inf
    %1459 = vmax.xlane.f32.xlu0 %v1458
    %v1460 = vpop.xlane.xlu0 %1459
    %v1461 = vsub.f32 %v1456, %v1460
    %v1462 = vmul.f32 %v1461, 1.442695
    %v1463 = vpow.pop %v1462
    %v1464 = vsel %vm301, %v1463, 0.0
    %1465 = vadd.xlane.f32.xlu0 %v1464
    %v1466 = vpop.xlane.xlu0 %1465
    %v1467 = vrcp.pop %v1466
    %v1468 = vmul.f32 %v1463, %v1467
    %1469 = vrot.lane.b32.xlu0 %v1027, 80
    %v1470 = vpop.permute.xlu0 %1469
    %v1473 = vsel %vm301, %v1468, 0
    %1475 = vmatpush.msra.mxu0 0.0
    %1476 = vmatpush.msra.mxu0 0.0
    %1477 = vmatpush.msra.mxu0 0.0
    %1478 = vmatpush.msra.mxu0 0.0
    %1479 = vmatpush.msra.mxu0 0.0
    %1480 = vmatpush.msra.mxu0 0.0
    %1481 = vmatpush.msra.mxu0 0.0
    %1482 = vmatpush.msra.mxu0 0.0
    %1483 = vmatpush.msra.mxu0 0.0
    %1484 = vmatpush.msra.mxu0 0.0
    %1485 = vmatpush.msra.mxu0 0.0
    %1486 = vmatpush.msra.mxu0 0.0
    %1487 = vmatpush.msra.mxu0 0.0
    %1488 = vmatpush.msra.mxu0 0.0
    %1489 = vmatpush.msra.mxu0 0.0
    %1490 = vmatpush.msra.mxu0 %v1470
    %1491 = vmatmul.f32.gmra.mxu0 %v1473
    %v1492 = vpop.f32.mrf.mxu0
    %v1493 = vadd.f32 0.0, %v1492
    %1494 = vdwg.mxu0
    %1495 = vrot.lane.b32.xlu0 %v979, 104
    %v1496 = vpop.permute.xlu0 %1495
    %1497 = vrot.lane.b32.xlu0 %v1027, 104
    %v1498 = vpop.permute.xlu0 %1497
    %v1499 = vsel %vm301, %v1496, 0
    %v1501 = vsel %vm301, %v1498, 0
    %1503 = vmatpush.xpose.msra.mxu0 0.0
    %1504 = vmatpush.xpose.msra.mxu0 0.0
    %1505 = vmatpush.xpose.msra.mxu0 0.0
    %1506 = vmatpush.xpose.msra.mxu0 0.0
    %1507 = vmatpush.xpose.msra.mxu0 0.0
    %1508 = vmatpush.xpose.msra.mxu0 0.0
    %1509 = vmatpush.xpose.msra.mxu0 0.0
    %1510 = vmatpush.xpose.msra.mxu0 0.0
    %1511 = vmatpush.xpose.msra.mxu0 0.0
    %1512 = vmatpush.xpose.msra.mxu0 0.0
    %1513 = vmatpush.xpose.msra.mxu0 0.0
    %1514 = vmatpush.xpose.msra.mxu0 0.0
    %1515 = vmatpush.xpose.msra.mxu0 0.0
    %1516 = vmatpush.xpose.msra.mxu0 0.0
    %1517 = vmatpush.xpose.msra.mxu0 0.0
    %1518 = vmatpush.xpose.msra.mxu0 %v1501
    %1519 = vmatmul.f32.gmra.mxu0 %v1499
    %v1520 = vpop.f32.mrf.mxu0
    %v1521 = vadd.f32 %v191, %v1520
    %1522 = vdwg.mxu0
    %v1523 = vsel %vm301, %v1521, -inf
    %1524 = vmax.xlane.f32.xlu0 %v1523
    %v1525 = vpop.xlane.xlu0 %1524
    %v1526 = vsub.f32 %v1521, %v1525
    %v1527 = vmul.f32 %v1526, 1.442695
    %v1528 = vpow.pop %v1527
    %v1529 = vsel %vm301, %v1528, 0.0
    %1530 = vadd.xlane.f32.xlu0 %v1529
    %v1531 = vpop.xlane.xlu0 %1530
    %v1532 = vrcp.pop %v1531
    %v1533 = vmul.f32 %v1528, %v1532
    %1534 = vrot.lane.b32.xlu0 %v1027, 72
    %v1535 = vpop.permute.xlu0 %1534
    %v1538 = vsel %vm301, %v1533, 0
    %1540 = vmatpush.msra.mxu0 0.0
    %1541 = vmatpush.msra.mxu0 0.0
    %1542 = vmatpush.msra.mxu0 0.0
    %1543 = vmatpush.msra.mxu0 0.0
    %1544 = vmatpush.msra.mxu0 0.0
    %1545 = vmatpush.msra.mxu0 0.0
    %1546 = vmatpush.msra.mxu0 0.0
    %1547 = vmatpush.msra.mxu0 0.0
    %1548 = vmatpush.msra.mxu0 0.0
    %1549 = vmatpush.msra.mxu0 0.0
    %1550 = vmatpush.msra.mxu0 0.0
    %1551 = vmatpush.msra.mxu0 0.0
    %1552 = vmatpush.msra.mxu0 0.0
    %1553 = vmatpush.msra.mxu0 0.0
    %1554 = vmatpush.msra.mxu0 0.0
    %1555 = vmatpush.msra.mxu0 %v1535
    %1556 = vmatmul.f32.gmra.mxu0 %v1538
    %v1557 = vpop.f32.mrf.mxu0
    %v1558 = vadd.f32 0.0, %v1557
    %1559 = vdwg.mxu0
    %1561 = vrot.lane.b32.xlu0 %v1428, 8
    %v1562 = vpop.permute.xlu0 %1561
    %1565 = vrot.lane.b32.xlu0 %v1493, 16
    %v1566 = vpop.permute.xlu0 %1565
    %1569 = vrot.lane.b32.xlu0 %v1558, 24
    %v1570 = vpop.permute.xlu0 %1569
    %v1572 = vsel %vm301, %v1363, %v1562
    %v1573 = vsel %vm571, %v1572, %v1566
    %v1574 = vsel %vm573, %v1573, %v1570
    %v1576 = vperm.slane %v948, 0
    %v1579 = vsel %vm194, %v1301, 0
    %v1582 = vsel %vm194, %v1574, 0
    %1584 = vmatpush.msra.mxu0 0.0
    %1585 = vmatpush.msra.mxu0 0.0
    %1586 = vmatpush.msra.mxu0 0.0
    %1587 = vmatpush.msra.mxu0 0.0
    %1588 = vmatpush.msra.mxu0 0.0
    %1589 = vmatpush.msra.mxu0 0.0
    %1590 = vmatpush.msra.mxu0 0.0
    %1591 = vmatpush.msra.mxu0 0.0
    %1592 = vmatpush.msra.mxu0 0.0
    %1593 = vmatpush.msra.mxu0 0.0
    %1594 = vmatpush.msra.mxu0 0.0
    %1595 = vmatpush.msra.mxu0 0.0
    %1596 = vmatpush.msra.mxu0 %v947
    %1597 = vmatpush.msra.mxu0 %v946
    %1598 = vmatpush.msra.mxu0 %v945
    %1599 = vmatpush.msra.mxu0 %v944
    %1600 = vmatmul.f32.gmra.mxu0 %v1579
    %v1601 = vpop.f32.mrf.mxu0
    %v1602 = vadd.f32 %v1576, %v1601
    %1603 = vmatmul.f32.gmra.mxu0 %v1582
    %v1604 = vpop.f32.mrf.mxu0
    %v1605 = vadd.f32 %v1576, %v1604
    %1606 = vdwg.mxu0
    %v1607 = vadd.f32 %v881, %v1602
    %v1608 = vadd.f32 %v882, %v1605
    %v1609 = vld [vmem:[%s16] sm:$0x1]
    %v1610 = vld [vmem:[%s17] sm:$0x1]
    %v1611 = vsel %vm194, %v1607, 0.0
    %1612 = vadd.xlane.f32.xlu0 %v1611
    %v1613 = vpop.xlane.xlu0 %1612
    %v1614 = vsel %vm194, %v1608, 0.0
    %1615 = vadd.xlane.f32.xlu0 %v1614
    %v1616 = vpop.xlane.xlu0 %1615
    %v1617 = vmul.f32 %v1613, %v207
    %v1618 = vmul.f32 %v1616, %v207
    %v1619 = vsub.f32 %v1607, %v1617
    %v1620 = vsub.f32 %v1608, %v1618
    %v1621 = vmul.f32 %v1619, %v1619
    %v1622 = vmul.f32 %v1620, %v1620
    %v1623 = vsel %vm194, %v1621, 0.0
    %1624 = vadd.xlane.f32.xlu0 %v1623
    %v1625 = vpop.xlane.xlu0 %1624
    %v1626 = vsel %vm194, %v1622, 0.0
    %1627 = vadd.xlane.f32.xlu0 %v1626
    %v1628 = vpop.xlane.xlu0 %1627
    %v1629 = vmul.f32 %v1625, %v207
    %v1630 = vmul.f32 %v1628, %v207
    %v1631 = vadd.f32 %v1629, 1e-06
    %v1632 = vadd.f32 %v1630, 1e-06
    %v1633 = vrsqrt.pop %v1631
    %v1634 = vmul.f32 %v1633, %v1631
    %v1635 = vmul.f32 %v1634, %v1633
    %v1636 = vmul.f32 0.5, %v1635
    %v1637 = vsub.f32 1.5, %v1636
    %v1638 = vmul.f32 %v1633, %v1637
    %vm1639 = vweird.f32 %v1631
    %vm1640 = vweird.f32 %v1633
    %vm1641 = vmor %vm1639, %vm1640
    %v1642 = vsel %vm1641, %v1633, %v1638
    %v1643 = vrsqrt.pop %v1632
    %v1644 = vmul.f32 %v1643, %v1632
    %v1645 = vmul.f32 %v1644, %v1643
    %v1646 = vmul.f32 0.5, %v1645
    %v1647 = vsub.f32 1.5, %v1646
    %v1648 = vmul.f32 %v1643, %v1647
    %vm1649 = vweird.f32 %v1632
    %vm1650 = vweird.f32 %v1643
    %vm1651 = vmor %vm1649, %vm1650
    %v1652 = vsel %vm1651, %v1643, %v1648
    %v1653 = vmul.f32 %v1619, %v1642
    %v1654 = vmul.f32 %v1620, %v1652
    %v1656 = vperm.slane %v1609, 0
    %v1658 = vmul.f32 %v1653, %v1656
    %v1659 = vmul.f32 %v1654, %v1656
    %v1661 = vperm.slane %v1610, 0
    %v1663 = vadd.f32 %v1658, %v1661
    %v1664 = vadd.f32 %v1659, %v1661
    %v1665 = vld [vmem:[#allocation11] sm:$0xff]
    %v1666 = vld [vmem:[#allocation11 + $0x8] sm:$0xff]
    %v1667 = vld [vmem:[#allocation11 + $0x10] sm:$0xff]
    %v1668 = vld [vmem:[#allocation11 + $0x18] sm:$0xff]
    %v1669 = vld [vmem:[%s19] sm:$0x1]
    %v1671 = vperm.slane %v1669, 0
    %v1674 = vsel %vm194, %v1663, 0
    %v1677 = vsel %vm194, %v1664, 0
    %1679 = vmatpush.msra.mxu0 0.0
    %1680 = vmatpush.msra.mxu0 0.0
    %1681 = vmatpush.msra.mxu0 0.0
    %1682 = vmatpush.msra.mxu0 0.0
    %1683 = vmatpush.msra.mxu0 0.0
    %1684 = vmatpush.msra.mxu0 0.0
    %1685 = vmatpush.msra.mxu0 0.0
    %1686 = vmatpush.msra.mxu0 0.0
    %1687 = vmatpush.msra.mxu0 0.0
    %1688 = vmatpush.msra.mxu0 0.0
    %1689 = vmatpush.msra.mxu0 0.0
    %1690 = vmatpush.msra.mxu0 0.0
    %1691 = vmatpush.msra.mxu0 %v1668
    %1692 = vmatpush.msra.mxu0 %v1667
    %1693 = vmatpush.msra.mxu0 %v1666
    %1694 = vmatpush.msra.mxu0 %v1665
    %1695 = vmatmul.f32.gmra.mxu0 %v1674
    %v1696 = vpop.f32.mrf.mxu0
    %v1697 = vadd.f32 %v1671, %v1696
    %1698 = vmatmul.f32.gmra.mxu0 %v1677
    %v1699 = vpop.f32.mrf.mxu0
    %v1700 = vadd.f32 %v1671, %v1699
    %1701 = vdwg.mxu0
    %v1702 = vmax.f32 %v1697, 0.0
    %v1703 = vmax.f32 %v1700, 0.0
    %v1704 = vld [vmem:[%s20] sm:$0xff]
    %v1705 = vld [vmem:[%s20 + $0x8] sm:$0xff]
    %v1706 = vld [vmem:[%s20 + $0x10] sm:$0xff]
    %v1707 = vld [vmem:[%s20 + $0x18] sm:$0xff]
    %v1708 = vld [vmem:[%s20 + $0x20] sm:$0xff]
    %v1709 = vld [vmem:[%s20 + $0x28] sm:$0xff]
    %v1710 = vld [vmem:[%s20 + $0x30] sm:$0xff]
    %v1711 = vld [vmem:[%s20 + $0x38] sm:$0xff]
    %v1712 = vld [vmem:[%s21] sm:$0x1]
    %v1714 = vperm.slane %v1712, 0
    %vm1716 = vcmask 523264
    %v1718 = vsel %vm1716, %v1702, 0
    %v1721 = vsel %vm1716, %v1703, 0
    %1723 = vmatpush.msra.mxu0 0.0
    %1724 = vmatpush.msra.mxu0 0.0
    %1725 = vmatpush.msra.mxu0 0.0
    %1726 = vmatpush.msra.mxu0 0.0
    %1727 = vmatpush.msra.mxu0 0.0
    %1728 = vmatpush.msra.mxu0 0.0
    %1729 = vmatpush.msra.mxu0 0.0
    %1730 = vmatpush.msra.mxu0 0.0
    %1731 = vmatpush.msra.mxu0 %v1711
    %1732 = vmatpush.msra.mxu0 %v1710
    %1733 = vmatpush.msra.mxu0 %v1709
    %1734 = vmatpush.msra.mxu0 %v1708
    %1735 = vmatpush.msra.mxu0 %v1707
    %1736 = vmatpush.msra.mxu0 %v1706
    %1737 = vmatpush.msra.mxu0 %v1705
    %1738 = vmatpush.msra.mxu0 %v1704
    %1739 = vmatmul.f32.gmra.mxu0 %v1718
    %v1740 = vpop.f32.mrf.mxu0
    %v1741 = vadd.f32 %v1714, %v1740
    %1742 = vmatmul.f32.gmra.mxu0 %v1721
    %v1743 = vpop.f32.mrf.mxu0
    %v1744 = vadd.f32 %v1714, %v1743
    %1745 = vdwg.mxu0
    %v1746 = vadd.f32 %v1741, %v1607
    %v1747 = vadd.f32 %v1744, %v1608
    %v1748 = vld [vmem:[%s22] sm:$0x1]
    %v1749 = vld [vmem:[%s23] sm:$0x1]
    %v1750 = vsel %vm194, %v1746, 0.0
    %1751 = vadd.xlane.f32.xlu0 %v1750
    %v1752 = vpop.xlane.xlu0 %1751
    %v1753 = vsel %vm194, %v1747, 0.0
    %1754 = vadd.xlane.f32.xlu0 %v1753
    %v1755 = vpop.xlane.xlu0 %1754
    %v1756 = vmul.f32 %v1752, %v207
    %v1757 = vmul.f32 %v1755, %v207
    %v1758 = vsub.f32 %v1746, %v1756
    %v1759 = vsub.f32 %v1747, %v1757
    %v1760 = vmul.f32 %v1758, %v1758
    %v1761 = vmul.f32 %v1759, %v1759
    %v1762 = vsel %vm194, %v1760, 0.0
    %1763 = vadd.xlane.f32.xlu0 %v1762
    %v1764 = vpop.xlane.xlu0 %1763
    %v1765 = vsel %vm194, %v1761, 0.0
    %1766 = vadd.xlane.f32.xlu0 %v1765
    %v1767 = vpop.xlane.xlu0 %1766
    %v1768 = vmul.f32 %v1764, %v207
    %v1769 = vmul.f32 %v1767, %v207
    %v1770 = vadd.f32 %v1768, 1e-06
    %v1771 = vadd.f32 %v1769, 1e-06
    %v1772 = vrsqrt.pop %v1770
    %v1773 = vmul.f32 %v1772, %v1770
    %v1774 = vmul.f32 %v1773, %v1772
    %v1775 = vmul.f32 0.5, %v1774
    %v1776 = vsub.f32 1.5, %v1775
    %v1777 = vmul.f32 %v1772, %v1776
    %vm1778 = vweird.f32 %v1770
    %vm1779 = vweird.f32 %v1772
    %vm1780 = vmor %vm1778, %vm1779
    %v1781 = vsel %vm1780, %v1772, %v1777
    %v1782 = vrsqrt.pop %v1771
    %v1783 = vmul.f32 %v1782, %v1771
    %v1784 = vmul.f32 %v1783, %v1782
    %v1785 = vmul.f32 0.5, %v1784
    %v1786 = vsub.f32 1.5, %v1785
    %v1787 = vmul.f32 %v1782, %v1786
    %vm1788 = vweird.f32 %v1771
    %vm1789 = vweird.f32 %v1782
    %vm1790 = vmor %vm1788, %vm1789
    %v1791 = vsel %vm1790, %v1782, %v1787
    %v1792 = vmul.f32 %v1758, %v1781
    %v1793 = vmul.f32 %v1759, %v1791
    %v1795 = vperm.slane %v1748, 0
    %v1797 = vmul.f32 %v1792, %v1795
    %v1798 = vmul.f32 %v1793, %v1795
    %v1800 = vperm.slane %v1749, 0
    %v1802 = vadd.f32 %v1797, %v1800
    %v1803 = vadd.f32 %v1798, %v1800
    %v1804 = vld [vmem:[#allocation13] sm:$0xff]
    %v1805 = vld [vmem:[#allocation13 + $0x8] sm:$0xff]
    %v1806 = vld [vmem:[#allocation13 + $0x10] sm:$0xff]
    %v1807 = vld [vmem:[#allocation13 + $0x18] sm:$0xff]
    %v1809 = vsel %vm194, %v1802, 0
    %v1812 = vsel %vm194, %v1803, 0
    %1814 = vmatpush.msra.mxu0 0.0
    %1815 = vmatpush.msra.mxu0 0.0
    %1816 = vmatpush.msra.mxu0 0.0
    %1817 = vmatpush.msra.mxu0 0.0
    %1818 = vmatpush.msra.mxu0 0.0
    %1819 = vmatpush.msra.mxu0 0.0
    %1820 = vmatpush.msra.mxu0 0.0
    %1821 = vmatpush.msra.mxu0 0.0
    %1822 = vmatpush.msra.mxu0 0.0
    %1823 = vmatpush.msra.mxu0 0.0
    %1824 = vmatpush.msra.mxu0 0.0
    %1825 = vmatpush.msra.mxu0 0.0
    %1826 = vmatpush.msra.mxu0 %v1807
    %1827 = vmatpush.msra.mxu0 %v1806
    %1828 = vmatpush.msra.mxu0 %v1805
    %1829 = vmatpush.msra.mxu0 %v1804
    %1830 = vmatmul.f32.gmra.mxu0 %v1809
    %v1831 = vpop.f32.mrf.mxu0
    %v1832 = vadd.f32 0.0, %v1831
    %1833 = vmatmul.f32.gmra.mxu0 %v1812
    %v1834 = vpop.f32.mrf.mxu0
    %v1835 = vadd.f32 0.0, %v1834
    %1836 = vdwg.mxu0
    %1837 = vst [vmem:[#allocation14] sm:$0xff] %v1832
    %1838 = vst [vmem:[#allocation14 + $0x8] sm:$0xff] %v1835
    // Predicated region
    $region130: #{tpu_custom_call.1} parent=1 // pred_check
      _
    $region131: #{tpu_custom_call.1} parent=1 // pred_check_branch
      %1840 = sbr.rel (0) target = $region133
    $region132: #{tpu_custom_call.1} parent=1 // pred_region
      %1842 = vsyncadd [#allocation4], 0
      %s1843 = sshll.u32 [#allocation14], 4
      %s1844 = int_to_ptr.vmem [resolvable:$true] %s1843
      %s1845 = sshll.u32 %s25, 4
      %s1846 = int_to_ptr.hbm [resolvable:$true] %s1845
      %1851 = dma.vmem_to_hbm [thread:$0]  %s1844, 256, %s1846, [#allocation4], 128, 128, 8
    $region133: #{tpu_custom_call.1} parent=1 // pred_fallthru
      _
    // Predicated region
    $region134: #{tpu_custom_call.1} parent=1 // pred_check
      _
    $region135: #{tpu_custom_call.1} parent=1 // pred_check_branch
      %1853 = sbr.rel (0) target = $region137
    $region136: #{tpu_custom_call.1} parent=1 // pred_region
      %1855 = dma.done [#allocation4], 256
    $region137: #{tpu_custom_call.1} parent=1 // pred_fallthru
      _
    %1856 = vsyncpa [#allocation3], 1
    %1857 = vsyncpa [#allocation6], 1
    %1858 = vsyncpa [#allocation9], 1
    %1859 = vsyncpa [#allocation12], 1
    %1860 = vsyncpa [#allocation4], 1

</llo_original>
